<compile_context>
chip_gen: v7x
topology: tpu7x:2x2x1
jax: 0.10.0
libtpu: 0.0.40
codegen_flags: <defaults>
</compile_context>

<pallas_src>
import functools

import jax
import jax.numpy as jnp
from jax.experimental import pallas as pl
from jax.experimental.pallas import tpu as pltpu

_LANE = 128
_MAX_TILE = 512


def _round_up(v, m):
    return ((v + m - 1) // m) * m


def _pick_tile(dim, max_tile=_MAX_TILE, unit=_LANE):
    return max(unit, min(max_tile, _round_up(dim, unit)))


def _vmem_capacity_bytes():
    try:
        return int(pltpu.get_tpu_info().vmem_capacity_bytes)
    except Exception:
        return 64 * 1024 * 1024  # conservative (v7x-sized) fallback


def _masked_log_softmax(logits, num_classes):
    """log_softmax over the last dim, ignoring zero-padded class columns."""
    col = jax.lax.broadcasted_iota(jnp.int32, logits.shape, 1)
    logits = jnp.where(col < num_classes, logits, -1e30)
    m = jnp.max(logits, axis=1, keepdims=True)
    z = logits - m
    lse = jnp.log(jnp.sum(jnp.exp(z), axis=1, keepdims=True))
    return z - lse


# ---------------------------------------------------------------------------
# Kernel bodies
# ---------------------------------------------------------------------------
def _xw_kernel(x_ref, w_ref, o_ref, acc_ref):
    """h0 = X @ W^T, tiled over (row block i, feature-contraction block k)."""
    k = pl.program_id(1)

    @pl.when(k == 0)
    def _():
        acc_ref[...] = jnp.zeros_like(acc_ref)

    acc_ref[...] += jnp.dot(x_ref[...], w_ref[...],
                            preferred_element_type=jnp.float32)

    @pl.when(k == pl.num_programs(1) - 1)
    def _():
        o_ref[...] = acc_ref[...].astype(o_ref.dtype)


def _xw_logsoftmax_kernel(num_classes, x_ref, w_ref, b_ref, o_ref, acc_ref):
    """K == 0 degenerate case: log_softmax(X @ W^T + b); no propagation pass."""
    k = pl.program_id(1)

    @pl.when(k == 0)
    def _():
        acc_ref[...] = jnp.zeros_like(acc_ref)

    acc_ref[...] += jnp.dot(x_ref[...], w_ref[...],
                            preferred_element_type=jnp.float32)

    @pl.when(k == pl.num_programs(1) - 1)
    def _():
        out = _masked_log_softmax(acc_ref[...] + b_ref[...], num_classes)
        o_ref[...] = out.astype(o_ref.dtype)


def _fused_prop_kernel(num_classes, num_hops, tm, tk, s_resident,
                       s_ref, h0_ref, b_ref, o_ref, hbuf_ref, acc_ref):
    """All K propagation hops fused: h_{t+1} = S @ h_t with h ping-ponging in VMEM.

    grid = (hop t, row block i, contraction block k); all axes sequential.
    The final hop fuses bias + masked log_softmax and is the only HBM write.
    """
    t = pl.program_id(0)
    i = pl.program_id(1)
    k = pl.program_id(2)
    nk = pl.num_programs(2)

    ii = pl.multiple_of(i * tm, tm)
    kk = pl.multiple_of(k * tk, tk)

    src = t % 2        # ping-pong slot holding h_t
    dst = 1 - src      # slot receiving h_{t+1}

    # Stage h0 (= X W^T) into slot 0, one contraction block at a time, right
    # before row block 0 of hop 0 consumes it.
    @pl.when((t == 0) & (i == 0))
    def _():
        hbuf_ref[0, pl.ds(kk, tk), :] = h0_ref[pl.ds(kk, tk), :]

    @pl.when(k == 0)
    def _():
        acc_ref[...] = jnp.zeros_like(acc_ref)

    if s_resident:
        s_blk = s_ref[pl.ds(ii, tm), pl.ds(kk, tk)]   # S lives whole in VMEM
    else:
        s_blk = s_ref[...]                            # streamed (tm, tk) tile

    h_blk = hbuf_ref[src, pl.ds(kk, tk), :]
    acc_ref[...] += jnp.dot(s_blk, h_blk, preferred_element_type=jnp.float32)

    @pl.when(k == nk - 1)
    def _():
        @pl.when(t < num_hops - 1)
        def _():
            hbuf_ref[dst, pl.ds(ii, tm), :] = acc_ref[...].astype(hbuf_ref.dtype)

        @pl.when(t == num_hops - 1)
        def _():
            out = _masked_log_softmax(acc_ref[...] + b_ref[...], num_classes)
            o_ref[...] = out.astype(o_ref.dtype)


# ---------------------------------------------------------------------------
# pallas_call wrappers
# ---------------------------------------------------------------------------
def _linear(x_p, wt_p, tm, tf):
    n_pad, f_pad = x_p.shape
    c_pad = wt_p.shape[1]
    return pl.pallas_call(
        _xw_kernel,
        out_shape=jax.ShapeDtypeStruct((n_pad, c_pad), jnp.bfloat16),
        grid_spec=pltpu.PrefetchScalarGridSpec(
            num_scalar_prefetch=0,
            grid=(n_pad // tm, f_pad // tf),
            in_specs=[
                pl.BlockSpec((tm, tf), lambda i, k: (i, k)),
                pl.BlockSpec((tf, c_pad), lambda i, k: (k, 0)),
            ],
            out_specs=pl.BlockSpec((tm, c_pad), lambda i, k: (i, 0)),
            scratch_shapes=[pltpu.VMEM((tm, c_pad), jnp.float32)],
        ),
        compiler_params=pltpu.CompilerParams(
            dimension_semantics=("parallel", "arbitrary")),
    )(x_p, wt_p)


def _linear_logsoftmax(x_p, wt_p, b_p, num_classes, tm, tf):
    n_pad, f_pad = x_p.shape
    c_pad = wt_p.shape[1]
    kernel = functools.partial(_xw_logsoftmax_kernel, num_classes)
    return pl.pallas_call(
        kernel,
        out_shape=jax.ShapeDtypeStruct((n_pad, c_pad), jnp.float32),
        grid_spec=pltpu.PrefetchScalarGridSpec(
            num_scalar_prefetch=0,
            grid=(n_pad // tm, f_pad // tf),
            in_specs=[
                pl.BlockSpec((tm, tf), lambda i, k: (i, k)),
                pl.BlockSpec((tf, c_pad), lambda i, k: (k, 0)),
                pl.BlockSpec((1, c_pad), lambda i, k: (0, 0)),
            ],
            out_specs=pl.BlockSpec((tm, c_pad), lambda i, k: (i, 0)),
            scratch_shapes=[pltpu.VMEM((tm, c_pad), jnp.float32)],
        ),
        compiler_params=pltpu.CompilerParams(
            dimension_semantics=("parallel", "arbitrary")),
    )(x_p, wt_p, b_p)


def _propagate_fused(s_p, h0, b_p, num_classes, num_hops, tm, tk):
    n_pad, c_pad = h0.shape
    nr = n_pad // tm
    nk = n_pad // tk

    # VMEM budget estimate (x2 on pipelined blocks for double buffering).
    base = (2 * n_pad * c_pad * 2      # h0 resident input
            + 2 * n_pad * c_pad * 2    # h ping-pong scratch
            + tm * c_pad * 4           # f32 accumulator
            + 2 * tm * c_pad * 4       # output block
            + 2 * c_pad * 4)           # bias
    cap = _vmem_capacity_bytes()
    s_resident = (base + 2 * n_pad * n_pad * 2) <= int(0.70 * cap)

    if s_resident:
        # Non-revisiting BlockSpec: S is DMA'd once and stays VMEM-resident
        # across all K hops (the dominant byte stream is paid once, not K times).
        s_spec = pl.BlockSpec((n_pad, n_pad), lambda t, i, k: (0, 0))
        est = base + 2 * n_pad * n_pad * 2
    else:
        s_spec = pl.BlockSpec((tm, tk), lambda t, i, k: (i, k))
        est = base + 2 * tm * tk * 2
    vmem_limit = int(min(max(est + (8 << 20), 32 << 20), int(0.9 * cap)))

    kernel = functools.partial(_fused_prop_kernel, num_classes, num_hops,
                               tm, tk, s_resident)
    return pl.pallas_call(
        kernel,
        out_shape=jax.ShapeDtypeStruct((n_pad, c_pad), jnp.float32),
        grid_spec=pltpu.PrefetchScalarGridSpec(
            num_scalar_prefetch=0,
            grid=(num_hops, nr, nk),
            in_specs=[
                s_spec,
                pl.BlockSpec((n_pad, c_pad), lambda t, i, k: (0, 0)),  # h0 resident
                pl.BlockSpec((1, c_pad), lambda t, i, k: (0, 0)),      # bias resident
            ],
            out_specs=pl.BlockSpec((tm, c_pad), lambda t, i, k: (i, 0)),
            scratch_shapes=[
                pltpu.VMEM((2, n_pad, c_pad), jnp.bfloat16),   # h ping-pong
                pltpu.VMEM((tm, c_pad), jnp.float32),          # accumulator
            ],
        ),
        compiler_params=pltpu.CompilerParams(
            # Hops must run in order and every row block of hop t must finish
            # before hop t+1 reads the shared VMEM ping-pong buffer, so every
            # grid axis stays sequential.
            dimension_semantics=("arbitrary", "arbitrary", "arbitrary"),
            vmem_limit_bytes=vmem_limit),
    )(s_p, h0, b_p)


# ---------------------------------------------------------------------------
# Forward pass
# ---------------------------------------------------------------------------
def sgc_forward(x, edge_index, weight, bias, K):
    """x: [N, F] f32, edge_index: [2, E] int32, weight: [C, F] f32, bias: [C] f32."""
    N, F = x.shape
    C = weight.shape[0]

    tn = _pick_tile(N)   # node row / node-contraction tile (up to 512)
    tf = _pick_tile(F)   # feature-contraction tile (up to 512)
    n_pad = _round_up(N, tn)
    f_pad = _round_up(F, tf)
    c_pad = _round_up(C, _LANE)

    # ----- glue (plain JAX): dense normalized adjacency, built straight into
    # the padded buffer.
    # TODO(synk): sparse CSR SpMM propagation (scalar-prefetch, pattern P2)
    # instead of any dense N x N adjacency.
    src, dst = edge_index[0], edge_index[1]
    adj = jnp.zeros((n_pad, n_pad), jnp.float32).at[dst, src].add(1.0)
    adj = adj.at[jnp.arange(N), jnp.arange(N)].add(1.0)        # self loops
    deg = jnp.sum(adj, axis=1)
    dinv = jnp.where(deg > 0.0, jax.lax.rsqrt(deg), 0.0)
    s_p = (dinv[:, None] * adj * dinv[None, :]).astype(jnp.bfloat16)
    # TODO(synk): int8 (v5e/v6e) / fp8 (v7x) quantized S with per-tile scales.

    x_p = jnp.zeros((n_pad, f_pad), jnp.bfloat16).at[:N, :F].set(
        x.astype(jnp.bfloat16))
    wt_p = jnp.zeros((f_pad, c_pad), jnp.bfloat16).at[:F, :C].set(
        weight.T.astype(jnp.bfloat16))
    b_p = jnp.zeros((1, c_pad), jnp.float32).at[0, :C].set(bias)

    if K == 0:
        # Degenerate logistic-regression case: no propagation pass at all.
        out = _linear_logsoftmax(x_p, wt_p, b_p, C, tn, tf)
    else:
        h0 = _linear(x_p, wt_p, tn, tf)                        # [n_pad, c_pad] bf16
        out = _propagate_fused(s_p, h0, b_p, C, K, tn, tn)     # fused K hops
    return out[:N, :C]


if __name__ == "__main__":
    # Small synthetic "citation graph": N nodes, F features, C classes, K hops.
    N, F, C, E, K = 32, 16, 8, 64, 2

    key = jax.random.PRNGKey(0)
    kx, ke, kw, kb = jax.random.split(key, 4)

    x = jax.random.normal(kx, (N, F), dtype=jnp.float32)
    edge_index = jax.random.randint(ke, (2, E), 0, N, dtype=jnp.int32)

    # Deterministic Linear(F -> C) parameters.
    lim = 1.0 / jnp.sqrt(jnp.float32(F))
    weight = jax.random.uniform(kw, (C, F), jnp.float32, -lim, lim)
    bias = jax.random.uniform(kb, (C,), jnp.float32, -lim, lim)

    fwd = jax.jit(sgc_forward, static_argnums=(4,))
    out = fwd(x, edge_index, weight, bias, K)
    jax.block_until_ready(out)

    # ----- pure-JAX f32 reference -----
    src, dst = edge_index[0], edge_index[1]
    adj = jnp.zeros((N, N), jnp.float32).at[dst, src].add(1.0) + jnp.eye(N)
    deg = jnp.sum(adj, axis=1)
    dinv = jnp.where(deg > 0, jax.lax.rsqrt(deg), 0.0)
    s = dinv[:, None] * adj * dinv[None, :]
    h_ref = x
    for _ in range(K):
        h_ref = s @ h_ref
    ref = jax.nn.log_softmax(h_ref @ weight.T + bias, axis=1)

    assert out.shape == (N, C)
    rowsum = jnp.sum(jnp.exp(out), axis=1)
    assert bool(jnp.allclose(rowsum, 1.0, atol=1e-3))
    err = float(jnp.max(jnp.abs(out - ref)))
    assert err < 5e-2, err

    # K == 0 degenerate path (epilogue-only kernel, no propagation pass).
    out0 = fwd(x, edge_index, weight, bias, 0)
    jax.block_until_ready(out0)
    ref0 = jax.nn.log_softmax(x @ weight.T + bias, axis=1)
    err0 = float(jnp.max(jnp.abs(out0 - ref0)))
    assert err0 < 5e-2, err0

    print("KERNEL_OK")
</pallas_src>

<mosaic_0001>
module attributes {stable_mosaic.version = 11 : i64} {
  func.func private @main(%arg0: i32) attributes {dimension_semantics = [#tpu.dimension_semantics<core_parallel>], iteration_bounds = array<i64: 2>, tpu.core_type = #tpu.core_type<sc_scalar_subcore>, window_params = []} {
    return
  }
}

module attributes {stable_mosaic.version = 11 : i64} {
  func.func private @main(%arg0: i32) attributes {dimension_semantics = [#tpu.dimension_semantics<core_parallel>], iteration_bounds = array<i64: 2>, tpu.core_type = #tpu.core_type<sc_scalar_subcore>, window_params = []} {
    return
  }
}

module attributes {stable_mosaic.version = 11 : i64} {
  func.func @_xw_kernel(%arg0: i32, %arg1: i32, %arg2: memref<128x128xbf16, #tpu.memory_space<vmem>>, %arg3: memref<128x128xbf16, #tpu.memory_space<vmem>>, %arg4: memref<128x128xbf16, #tpu.memory_space<vmem>>, %arg5: memref<128x128xf32, #tpu.memory_space<vmem>>) attributes {dimension_semantics = [#tpu.dimension_semantics<parallel>, #tpu.dimension_semantics<arbitrary>], iteration_bounds = array<i64: 1, 1>, scalar_prefetch = 0 : i64, scratch_operands = 1 : i64, tpu.core_type = #tpu.core_type<tc>, window_params = [{transform_indices = @transform_0, window_bounds = array<i64: 128, 128>}, {transform_indices = @transform_1, window_bounds = array<i64: 128, 128>}, {transform_indices = @transform_2, window_bounds = array<i64: 128, 128>}]} {
    %c0_i32 = arith.constant 0 : i32
    %0 = arith.cmpi eq, %arg1, %c0_i32 : i32
    %1 = arith.extui %0 : i1 to i32
    %c0_i32_0 = arith.constant 0 : i32
    %2 = arith.cmpi ne, %1, %c0_i32_0 : i32
    scf.if %2 {
      %cst_10 = arith.constant 0.000000e+00 : f32
      %12 = vector.broadcast %cst_10 : f32 to vector<128x128xf32>
      %c0_11 = arith.constant 0 : index
      %c0_12 = arith.constant 0 : index
      %13 = vector.load %arg5[%c0_11, %c0_12] : memref<128x128xf32, #tpu.memory_space<vmem>>, vector<128x128xf32>
      tpu.vector_store %arg5[%c0_11, %c0_12], %12 {strides = array<i32>} : memref<128x128xf32, #tpu.memory_space<vmem>>, vector<128x128xf32>,
    } else {
    }
    %c0 = arith.constant 0 : index
    %c0_1 = arith.constant 0 : index
    %3 = vector.load %arg5[%c0, %c0_1] : memref<128x128xf32, #tpu.memory_space<vmem>>, vector<128x128xf32>
    %c0_2 = arith.constant 0 : index
    %c0_3 = arith.constant 0 : index
    %4 = vector.load %arg2[%c0_2, %c0_3] : memref<128x128xbf16, #tpu.memory_space<vmem>>, vector<128x128xbf16>
    %c0_4 = arith.constant 0 : index
    %c0_5 = arith.constant 0 : index
    %5 = vector.load %arg3[%c0_4, %c0_5] : memref<128x128xbf16, #tpu.memory_space<vmem>>, vector<128x128xbf16>
    %cst = arith.constant dense<0.000000e+00> : vector<128x128xf32>
    %6 = tpu.matmul %4, %5, %cst {dimension_numbers = #tpu.dot_dimension_numbers<[1], [0], [0], [1], [0, 0, 1, 1], [], []>} : vector<128x128xbf16>, vector<128x128xbf16>, vector<128x128xf32> -> vector<128x128xf32>
    %7 = arith.addf %3, %6 : vector<128x128xf32>
    %c0_6 = arith.constant 0 : index
    %c0_7 = arith.constant 0 : index
    %8 = vector.load %arg5[%c0_6, %c0_7] : memref<128x128xf32, #tpu.memory_space<vmem>>, vector<128x128xf32>
    tpu.vector_store %arg5[%c0_6, %c0_7], %7 {strides = array<i32>} : memref<128x128xf32, #tpu.memory_space<vmem>>, vector<128x128xf32>,
    %c0_i32_8 = arith.constant 0 : i32
    %9 = arith.cmpi eq, %arg1, %c0_i32_8 : i32
    %10 = arith.extui %9 : i1 to i32
    %c0_i32_9 = arith.constant 0 : i32
    %11 = arith.cmpi ne, %10, %c0_i32_9 : i32
    scf.if %11 {
      %c0_10 = arith.constant 0 : index
      %c0_11 = arith.constant 0 : index
      %12 = vector.load %arg5[%c0_10, %c0_11] : memref<128x128xf32, #tpu.memory_space<vmem>>, vector<128x128xf32>
      %13 = arith.truncf %12 : vector<128x128xf32> to vector<128x128xbf16>
      %c0_12 = arith.constant 0 : index
      %c0_13 = arith.constant 0 : index
      %14 = vector.load %arg4[%c0_12, %c0_13] : memref<128x128xbf16, #tpu.memory_space<vmem>>, vector<128x128xbf16>
      tpu.vector_store %arg4[%c0_12, %c0_13], %13 {strides = array<i32>} : memref<128x128xbf16, #tpu.memory_space<vmem>>, vector<128x128xbf16>,
    } else {
    }
    return
  }
  func.func @transform_0(%arg0: i32, %arg1: i32) -> (i32, i32) {
    %c0_i32 = arith.constant 0 : i32
    return %arg0, %arg1 : i32, i32
  }
  func.func @transform_1(%arg0: i32, %arg1: i32) -> (i32, i32) {
    %c0_i32 = arith.constant 0 : i32
    %c0_i32_0 = arith.constant 0 : i32
    return %arg1, %c0_i32 : i32, i32
  }
  func.func @transform_2(%arg0: i32, %arg1: i32) -> (i32, i32) {
    %c0_i32 = arith.constant 0 : i32
    %c0_i32_0 = arith.constant 0 : i32
    return %arg0, %c0_i32 : i32, i32
  }
}

module attributes {stable_mosaic.version = 11 : i64} {
  func.func @_fused_prop_kernel(%arg0: i32, %arg1: i32, %arg2: i32, %arg3: memref<128x128xbf16, #tpu.memory_space<vmem>>, %arg4: memref<128x128xbf16, #tpu.memory_space<vmem>>, %arg5: memref<1x128xf32, #tpu.memory_space<vmem>>, %arg6: memref<128x128xf32, #tpu.memory_space<vmem>>, %arg7: memref<2x128x128xbf16, #tpu.memory_space<vmem>>, %arg8: memref<128x128xf32, #tpu.memory_space<vmem>>) attributes {dimension_semantics = [#tpu.dimension_semantics<arbitrary>, #tpu.dimension_semantics<arbitrary>, #tpu.dimension_semantics<arbitrary>], iteration_bounds = array<i64: 2, 1, 1>, scalar_prefetch = 0 : i64, scratch_operands = 2 : i64, tpu.core_type = #tpu.core_type<tc>, window_params = [{pipeline_mode = #tpu.pipeline_mode<synchronous>, transform_indices = @transform_0, window_bounds = array<i64: 128, 128>}, {pipeline_mode = #tpu.pipeline_mode<synchronous>, transform_indices = @transform_1, window_bounds = array<i64: 128, 128>}, {pipeline_mode = #tpu.pipeline_mode<synchronous>, transform_indices = @transform_2, window_bounds = array<i64: 1, 128>}, {transform_indices = @transform_3, window_bounds = array<i64: 128, 128>}]} {
    %c128_i32 = arith.constant 128 : i32
    %0 = arith.muli %arg1, %c128_i32 : i32
    %1 = tpu.assume_multiple %0, 128 : i32
    %c128_i32_0 = arith.constant 128 : i32
    %2 = arith.muli %arg2, %c128_i32_0 : i32
    %3 = tpu.assume_multiple %2, 128 : i32
    %c2_i32 = arith.constant 2 : i32
    %c0_i32 = arith.constant 0 : i32
    %4 = arith.cmpi eq, %c2_i32, %c0_i32 : i32
    %c1_i32 = arith.constant 1 : i32
    %5 = arith.select %4, %c1_i32, %c2_i32 : i32
    %6 = arith.remsi %arg0, %5 : i32
    %c0_i32_1 = arith.constant 0 : i32
    %7 = arith.cmpi ne, %6, %c0_i32_1 : i32
    %c0_i32_2 = arith.constant 0 : i32
    %8 = arith.cmpi slt, %6, %c0_i32_2 : i32
    %c0_i32_3 = arith.constant 0 : i32
    %9 = arith.cmpi slt, %5, %c0_i32_3 : i32
    %10 = arith.xori %8, %9 : i1
    %11 = arith.andi %10, %7 : i1
    %12 = arith.addi %6, %5 : i32
    %13 = arith.select %11, %12, %6 : i32
    %c1_i32_4 = arith.constant 1 : i32
    %14 = arith.subi %c1_i32_4, %13 : i32
    %c0_i32_5 = arith.constant 0 : i32
    %15 = arith.cmpi eq, %arg0, %c0_i32_5 : i32
    %c0_i32_6 = arith.constant 0 : i32
    %16 = arith.cmpi eq, %arg1, %c0_i32_6 : i32
    %17 = arith.andi %15, %16 : i1
    %18 = arith.extui %17 : i1 to i32
    %c0_i32_7 = arith.constant 0 : i32
    %19 = arith.cmpi ne, %18, %c0_i32_7 : i32
    scf.if %19 {
      %37 = arith.index_cast %3 : i32 to index
      %c0_16 = arith.constant 0 : index
      %38 = vector.load %arg4[%37, %c0_16] : memref<128x128xbf16, #tpu.memory_space<vmem>>, vector<128x128xbf16>
      %c0_17 = arith.constant 0 : index
      %39 = arith.index_cast %3 : i32 to index
      %c0_18 = arith.constant 0 : index
      %40 = vector.load %arg7[%c0_17, %39, %c0_18] : memref<2x128x128xbf16, #tpu.memory_space<vmem>>, vector<1x128x128xbf16>
      %41 = vector.shape_cast %40 : vector<1x128x128xbf16> to vector<128x128xbf16>
      %42 = vector.shape_cast %38 : vector<128x128xbf16> to vector<1x128x128xbf16>
      tpu.vector_store %arg7[%c0_17, %39, %c0_18], %42 {strides = array<i32>} : memref<2x128x128xbf16, #tpu.memory_space<vmem>>, vector<1x128x128xbf16>,
    } else {
    }
    %c0_i32_8 = arith.constant 0 : i32
    %20 = arith.cmpi eq, %arg2, %c0_i32_8 : i32
    %21 = arith.extui %20 : i1 to i32
    %c0_i32_9 = arith.constant 0 : i32
    %22 = arith.cmpi ne, %21, %c0_i32_9 : i32
    scf.if %22 {
      %cst_16 = arith.constant 0.000000e+00 : f32
      %37 = vector.broadcast %cst_16 : f32 to vector<128x128xf32>
      %c0_17 = arith.constant 0 : index
      %c0_18 = arith.constant 0 : index
      %38 = vector.load %arg8[%c0_17, %c0_18] : memref<128x128xf32, #tpu.memory_space<vmem>>, vector<128x128xf32>
      tpu.vector_store %arg8[%c0_17, %c0_18], %37 {strides = array<i32>} : memref<128x128xf32, #tpu.memory_space<vmem>>, vector<128x128xf32>,
    } else {
    }
    %23 = arith.index_cast %1 : i32 to index
    %24 = arith.index_cast %3 : i32 to index
    %25 = vector.load %arg3[%23, %24] : memref<128x128xbf16, #tpu.memory_space<vmem>>, vector<128x128xbf16>
    %26 = arith.index_cast %13 : i32 to index
    %27 = arith.index_cast %3 : i32 to index
    %c0 = arith.constant 0 : index
    %28 = vector.load %arg7[%26, %27, %c0] : memref<2x128x128xbf16, #tpu.memory_space<vmem>>, vector<1x128x128xbf16>
    %29 = vector.shape_cast %28 : vector<1x128x128xbf16> to vector<128x128xbf16>
    %c0_10 = arith.constant 0 : index
    %c0_11 = arith.constant 0 : index
    %30 = vector.load %arg8[%c0_10, %c0_11] : memref<128x128xf32, #tpu.memory_space<vmem>>, vector<128x128xf32>
    %cst = arith.constant dense<0.000000e+00> : vector<128x128xf32>
    %31 = tpu.matmul %25, %29, %cst {dimension_numbers = #tpu.dot_dimension_numbers<[1], [0], [0], [1], [0, 0, 1, 1], [], []>} : vector<128x128xbf16>, vector<128x128xbf16>, vector<128x128xf32> -> vector<128x128xf32>
    %32 = arith.addf %30, %31 : vector<128x128xf32>
    %c0_12 = arith.constant 0 : index
    %c0_13 = arith.constant 0 : index
    %33 = vector.load %arg8[%c0_12, %c0_13] : memref<128x128xf32, #tpu.memory_space<vmem>>, vector<128x128xf32>
    tpu.vector_store %arg8[%c0_12, %c0_13], %32 {strides = array<i32>} : memref<128x128xf32, #tpu.memory_space<vmem>>, vector<128x128xf32>,
    %c0_i32_14 = arith.constant 0 : i32
    %34 = arith.cmpi eq, %arg2, %c0_i32_14 : i32
    %35 = arith.extui %34 : i1 to i32
    %c0_i32_15 = arith.constant 0 : i32
    %36 = arith.cmpi ne, %35, %c0_i32_15 : i32
    scf.if %36 {
      %c1_i32_16 = arith.constant 1 : i32
      %37 = arith.cmpi slt, %arg0, %c1_i32_16 : i32
      %38 = arith.extui %37 : i1 to i32
      %c0_i32_17 = arith.constant 0 : i32
      %39 = arith.cmpi ne, %38, %c0_i32_17 : i32
      scf.if %39 {
        %c0_20 = arith.constant 0 : index
        %c0_21 = arith.constant 0 : index
        %43 = vector.load %arg8[%c0_20, %c0_21] : memref<128x128xf32, #tpu.memory_space<vmem>>, vector<128x128xf32>
        %44 = arith.truncf %43 : vector<128x128xf32> to vector<128x128xbf16>
        %45 = arith.index_cast %14 : i32 to index
        %46 = arith.index_cast %1 : i32 to index
        %c0_22 = arith.constant 0 : index
        %47 = vector.load %arg7[%45, %46, %c0_22] : memref<2x128x128xbf16, #tpu.memory_space<vmem>>, vector<1x128x128xbf16>
        %48 = vector.shape_cast %47 : vector<1x128x128xbf16> to vector<128x128xbf16>
        %49 = vector.shape_cast %44 : vector<128x128xbf16> to vector<1x128x128xbf16>
        tpu.vector_store %arg7[%45, %46, %c0_22], %49 {strides = array<i32>} : memref<2x128x128xbf16, #tpu.memory_space<vmem>>, vector<1x128x128xbf16>,
      } else {
      }
      %c1_i32_18 = arith.constant 1 : i32
      %40 = arith.cmpi eq, %arg0, %c1_i32_18 : i32
      %41 = arith.extui %40 : i1 to i32
      %c0_i32_19 = arith.constant 0 : i32
      %42 = arith.cmpi ne, %41, %c0_i32_19 : i32
      scf.if %42 {
        %c0_20 = arith.constant 0 : index
        %c0_21 = arith.constant 0 : index
        %43 = vector.load %arg8[%c0_20, %c0_21] : memref<128x128xf32, #tpu.memory_space<vmem>>, vector<128x128xf32>
        %c0_22 = arith.constant 0 : index
        %c0_23 = arith.constant 0 : index
        %44 = vector.load %arg5[%c0_22, %c0_23] : memref<1x128xf32, #tpu.memory_space<vmem>>, vector<1x128xf32>
        %45 = vector.broadcast %44 : vector<1x128xf32> to vector<128x128xf32>
        %46 = arith.addf %43, %45 : vector<128x128xf32>
        %47 = tpu.iota {dimensions = array<i32: 1>} : vector<128x128xi32>
        %c8_i32 = arith.constant 8 : i32
        %48 = vector.broadcast %c8_i32 : i32 to vector<128x128xi32>
        %49 = arith.cmpi slt, %47, %48 : vector<128x128xi32>
        %cst_24 = arith.constant -1.000000e+30 : f32
        %50 = vector.broadcast %cst_24 : f32 to vector<128x128xf32>
        %51 = arith.select %49, %46, %50 : vector<128x128xi1>, vector<128x128xf32>
        %cst_25 = arith.constant dense<0xFF800000> : vector<128xf32>
        %52 = vector.multi_reduction <maximumf>, %51, %cst_25 [1] : vector<128x128xf32> to vector<128xf32>
        %53 = vector.shape_cast %52 : vector<128xf32> to vector<128x1xf32>
        %54 = vector.broadcast %53 : vector<128x1xf32> to vector<128x128xf32>
        %55 = arith.subf %51, %54 : vector<128x128xf32>
        %56 = math.exp %55 : vector<128x128xf32>
        %cst_26 = arith.constant dense<0.000000e+00> : vector<128xf32>
        %57 = vector.multi_reduction <add>, %56, %cst_26 [1] : vector<128x128xf32> to vector<128xf32>
        %58 = vector.shape_cast %57 : vector<128xf32> to vector<128x1xf32>
        %59 = math.log %58 : vector<128x1xf32>
        %60 = vector.broadcast %59 : vector<128x1xf32> to vector<128x128xf32>
        %61 = arith.subf %55, %60 : vector<128x128xf32>
        %c0_27 = arith.constant 0 : index
        %c0_28 = arith.constant 0 : index
        %62 = vector.load %arg6[%c0_27, %c0_28] : memref<128x128xf32, #tpu.memory_space<vmem>>, vector<128x128xf32>
        tpu.vector_store %arg6[%c0_27, %c0_28], %61 {strides = array<i32>} : memref<128x128xf32, #tpu.memory_space<vmem>>, vector<128x128xf32>,
      } else {
      }
    } else {
    }
    return
  }
  func.func @transform_0(%arg0: i32, %arg1: i32, %arg2: i32) -> (i32, i32) {
    %c0_i32 = arith.constant 0 : i32
    %c0_i32_0 = arith.constant 0 : i32
    %c0_i32_1 = arith.constant 0 : i32
    return %c0_i32, %c0_i32_0 : i32, i32
  }
  func.func @transform_1(%arg0: i32, %arg1: i32, %arg2: i32) -> (i32, i32) {
    %c0_i32 = arith.constant 0 : i32
    %c0_i32_0 = arith.constant 0 : i32
    %c0_i32_1 = arith.constant 0 : i32
    return %c0_i32, %c0_i32_0 : i32, i32
  }
  func.func @transform_2(%arg0: i32, %arg1: i32, %arg2: i32) -> (i32, i32) {
    %c0_i32 = arith.constant 0 : i32
    %c0_i32_0 = arith.constant 0 : i32
    %c0_i32_1 = arith.constant 0 : i32
    return %c0_i32, %c0_i32_0 : i32, i32
  }
  func.func @transform_3(%arg0: i32, %arg1: i32, %arg2: i32) -> (i32, i32) {
    %c0_i32 = arith.constant 0 : i32
    %c0_i32_0 = arith.constant 0 : i32
    return %arg1, %c0_i32 : i32, i32
  }
}

</mosaic_0001>

<llo_original>
// kernel: sgc_forward.2
$region0: #{sgc_forward.2}
  #allocation0 [shape = 'u32[]', space=smem, size = 0x4, offset = 0x4, fixed_abs, tag = 'smem constant byte address 0x4 - core index']
  #allocation1 [shape = 'u32[144,128]{1,0:T(1,128)}', space=vmem, size = 0x12000, scoped, tag = 'internal scratch']
  #allocation2 [shape = 'f32[128,128]{1,0:T(8,128)}', space=vmem, size = 0x10000, scoped, tag = 'scratch operand']
  %s0 = inlined_call_operand.vmem [shape: bf16[128,128], index: 0, kind: input, shape index: {}]
  %s1 = inlined_call_operand.vmem [shape: bf16[128,128], index: 1, kind: input, shape index: {}]
  %s2 = inlined_call_operand.vmem [shape: bf16[128,128], index: 2, kind: output, shape index: {}]
  %s3 = sld [smem:[#allocation0]]
  $region26: #{sgc_forward.2} parent=0
    _
  %s5 = ssub.s32 1, %s3
  %s6 = scalar_select 0, %s5, %s3
  // Predicated region
  $region2: #{sgc_forward.2} parent=0 // pred_check
    _
  $region3: #{sgc_forward.2} parent=0 // pred_check_branch
    %8 = sbr.rel (0) target = $region5
  $region4: #{sgc_forward.2} parent=0 // pred_region
    _
  $region5: #{sgc_forward.2} parent=0 // pred_fallthru
    _
  // Predicated region
  $region6: #{sgc_forward.2} parent=0 // pred_check
    _
  $region7: #{sgc_forward.2} parent=0 // pred_check_branch
    %10 = sbr.rel (0) target = $region9
  $region8: #{sgc_forward.2} parent=0 // pred_region
    _
  $region9: #{sgc_forward.2} parent=0 // pred_fallthru
    _
  %p12 = scmp.eq.s32.totalorder 0, 0
  // Predicated region
  $region10: #{sgc_forward.2} parent=0 // pred_check
    %p13 = pneg %p12
  $region11: #{sgc_forward.2} parent=0 // pred_check_branch
    %15 = sbr.rel (%p13) target = $region13
  $region12: #{sgc_forward.2} parent=0 // pred_region
    %16 = vst [vmem:[#allocation2] sm:$0xff] 0.0
    %17 = vst [vmem:[#allocation2 + $0x8] sm:$0xff] 0.0
    %18 = vst [vmem:[#allocation2 + $0x10] sm:$0xff] 0.0
    %19 = vst [vmem:[#allocation2 + $0x18] sm:$0xff] 0.0
    %20 = vst [vmem:[#allocation2 + $0x20] sm:$0xff] 0.0
    %21 = vst [vmem:[#allocation2 + $0x28] sm:$0xff] 0.0
    %22 = vst [vmem:[#allocation2 + $0x30] sm:$0xff] 0.0
    %23 = vst [vmem:[#allocation2 + $0x38] sm:$0xff] 0.0
    %24 = vst [vmem:[#allocation2 + $0x40] sm:$0xff] 0.0
    %25 = vst [vmem:[#allocation2 + $0x48] sm:$0xff] 0.0
    %26 = vst [vmem:[#allocation2 + $0x50] sm:$0xff] 0.0
    %27 = vst [vmem:[#allocation2 + $0x58] sm:$0xff] 0.0
    %28 = vst [vmem:[#allocation2 + $0x60] sm:$0xff] 0.0
    %29 = vst [vmem:[#allocation2 + $0x68] sm:$0xff] 0.0
    %30 = vst [vmem:[#allocation2 + $0x70] sm:$0xff] 0.0
    %31 = vst [vmem:[#allocation2 + $0x78] sm:$0xff] 0.0
  $region13: #{sgc_forward.2} parent=0 // pred_fallthru
    _
  %v32 = vld [vmem:[#allocation2] sm:$0xff]
  %v33 = vld [vmem:[#allocation2 + $0x8] sm:$0xff]
  %v34 = vld [vmem:[#allocation2 + $0x10] sm:$0xff]
  %v35 = vld [vmem:[#allocation2 + $0x18] sm:$0xff]
  %v36 = vld [vmem:[#allocation2 + $0x20] sm:$0xff]
  %v37 = vld [vmem:[#allocation2 + $0x28] sm:$0xff]
  %v38 = vld [vmem:[#allocation2 + $0x30] sm:$0xff]
  %v39 = vld [vmem:[#allocation2 + $0x38] sm:$0xff]
  %v40 = vld [vmem:[#allocation2 + $0x40] sm:$0xff]
  %v41 = vld [vmem:[#allocation2 + $0x48] sm:$0xff]
  %v42 = vld [vmem:[#allocation2 + $0x50] sm:$0xff]
  %v43 = vld [vmem:[#allocation2 + $0x58] sm:$0xff]
  %v44 = vld [vmem:[#allocation2 + $0x60] sm:$0xff]
  %v45 = vld [vmem:[#allocation2 + $0x68] sm:$0xff]
  %v46 = vld [vmem:[#allocation2 + $0x70] sm:$0xff]
  %v47 = vld [vmem:[#allocation2 + $0x78] sm:$0xff]
  %v48 = vld [vmem:[%s0] sm:$0xf]
  %v49 = vld [vmem:[%s0 + $0x4] sm:$0xf]
  %v50 = vld [vmem:[%s0 + $0x8] sm:$0xf]
  %v51 = vld [vmem:[%s0 + $0xc] sm:$0xf]
  %v52 = vld [vmem:[%s0 + $0x10] sm:$0xf]
  %v53 = vld [vmem:[%s0 + $0x14] sm:$0xf]
  %v54 = vld [vmem:[%s0 + $0x18] sm:$0xf]
  %v55 = vld [vmem:[%s0 + $0x1c] sm:$0xf]
  %v56 = vld [vmem:[%s0 + $0x20] sm:$0xf]
  %v57 = vld [vmem:[%s0 + $0x24] sm:$0xf]
  %v58 = vld [vmem:[%s0 + $0x28] sm:$0xf]
  %v59 = vld [vmem:[%s0 + $0x2c] sm:$0xf]
  %v60 = vld [vmem:[%s0 + $0x30] sm:$0xf]
  %v61 = vld [vmem:[%s0 + $0x34] sm:$0xf]
  %v62 = vld [vmem:[%s0 + $0x38] sm:$0xf]
  %v63 = vld [vmem:[%s0 + $0x3c] sm:$0xf]
  %v64 = vld [vmem:[%s1] sm:$0xf]
  %v65 = vld [vmem:[%s1 + $0x4] sm:$0xf]
  %v66 = vld [vmem:[%s1 + $0x8] sm:$0xf]
  %v67 = vld [vmem:[%s1 + $0xc] sm:$0xf]
  %v68 = vld [vmem:[%s1 + $0x10] sm:$0xf]
  %v69 = vld [vmem:[%s1 + $0x14] sm:$0xf]
  %v70 = vld [vmem:[%s1 + $0x18] sm:$0xf]
  %v71 = vld [vmem:[%s1 + $0x1c] sm:$0xf]
  %v72 = vld [vmem:[%s1 + $0x20] sm:$0xf]
  %v73 = vld [vmem:[%s1 + $0x24] sm:$0xf]
  %v74 = vld [vmem:[%s1 + $0x28] sm:$0xf]
  %v75 = vld [vmem:[%s1 + $0x2c] sm:$0xf]
  %v76 = vld [vmem:[%s1 + $0x30] sm:$0xf]
  %v77 = vld [vmem:[%s1 + $0x34] sm:$0xf]
  %v78 = vld [vmem:[%s1 + $0x38] sm:$0xf]
  %v79 = vld [vmem:[%s1 + $0x3c] sm:$0xf]
  %v96 = vunpack.c.l.b16 %v48
  %v97 = vunpack.c.l.b16 %v49
  %v98 = vunpack.c.l.b16 %v50
  %v99 = vunpack.c.l.b16 %v51
  %v100 = vunpack.c.l.b16 %v52
  %v101 = vunpack.c.l.b16 %v53
  %v102 = vunpack.c.l.b16 %v54
  %v103 = vunpack.c.l.b16 %v55
  %v104 = vunpack.c.l.b16 %v56
  %v105 = vunpack.c.l.b16 %v57
  %v106 = vunpack.c.l.b16 %v58
  %v107 = vunpack.c.l.b16 %v59
  %v108 = vunpack.c.l.b16 %v60
  %v109 = vunpack.c.l.b16 %v61
  %v110 = vunpack.c.l.b16 %v62
  %v111 = vunpack.c.l.b16 %v63
  %v112 = vpack.c.b16 %v97, %v96
  %v113 = vpack.c.b16 %v99, %v98
  %v114 = vpack.c.b16 %v101, %v100
  %v115 = vpack.c.b16 %v103, %v102
  %v116 = vpack.c.b16 %v105, %v104
  %v117 = vpack.c.b16 %v107, %v106
  %v118 = vpack.c.b16 %v109, %v108
  %v119 = vpack.c.b16 %v111, %v110
  %v144 = vunpack.c.l.b16 %v64
  %v145 = vunpack.c.l.b16 %v65
  %v146 = vunpack.c.l.b16 %v66
  %v147 = vunpack.c.l.b16 %v67
  %v148 = vunpack.c.l.b16 %v68
  %v149 = vunpack.c.l.b16 %v69
  %v150 = vunpack.c.l.b16 %v70
  %v151 = vunpack.c.l.b16 %v71
  %v152 = vunpack.c.l.b16 %v72
  %v153 = vunpack.c.l.b16 %v73
  %v154 = vunpack.c.l.b16 %v74
  %v155 = vunpack.c.l.b16 %v75
  %v156 = vunpack.c.l.b16 %v76
  %v157 = vunpack.c.l.b16 %v77
  %v158 = vunpack.c.l.b16 %v78
  %v159 = vunpack.c.l.b16 %v79
  %v160 = vpack.c.b16 %v145, %v144
  %v161 = vpack.c.b16 %v147, %v146
  %v162 = vpack.c.b16 %v149, %v148
  %v163 = vpack.c.b16 %v151, %v150
  %v164 = vpack.c.b16 %v153, %v152
  %v165 = vpack.c.b16 %v155, %v154
  %v166 = vpack.c.b16 %v157, %v156
  %v167 = vpack.c.b16 %v159, %v158
  %176 = vmatprep.subr.bf16.mxu0 0
  %177 = vmatpush1.bf16.msra.mxu0 %v160
  %178 = vmatprep.subr.bf16.mxu0 0
  %179 = vmatpush1.bf16.msra.mxu0 %v161
  %180 = vmatprep.subr.bf16.mxu0 0
  %181 = vmatpush1.bf16.msra.mxu0 %v162
  %182 = vmatprep.subr.bf16.mxu0 0
  %183 = vmatpush1.bf16.msra.mxu0 %v163
  %184 = vmatprep.subr.bf16.mxu0 0
  %185 = vmatpush1.bf16.msra.mxu0 %v164
  %186 = vmatprep.subr.bf16.mxu0 0
  %187 = vmatpush1.bf16.msra.mxu0 %v165
  %188 = vmatprep.subr.bf16.mxu0 0
  %189 = vmatpush1.bf16.msra.mxu0 %v166
  %190 = vmatprep.subr.bf16.mxu0 0
  %191 = vmatpush1.bf16.msra.mxu0 %v167
  %192 = vmatprep.subr.bf16.mxu0 0
  %193 = vmatpush1.bf16.msra.mxu0 0
  %194 = vmatprep.subr.bf16.mxu0 0
  %195 = vmatpush1.bf16.msra.mxu0 0
  %196 = vmatprep.subr.bf16.mxu0 0
  %197 = vmatpush1.bf16.msra.mxu0 0
  %198 = vmatprep.subr.bf16.mxu0 0
  %199 = vmatpush1.bf16.msra.mxu0 0
  %200 = vmatprep.subr.bf16.mxu0 0
  %201 = vmatpush1.bf16.msra.mxu0 0
  %202 = vmatprep.subr.bf16.mxu0 0
  %203 = vmatpush1.bf16.msra.mxu0 0
  %204 = vmatprep.subr.bf16.mxu0 0
  %205 = vmatpush1.bf16.msra.mxu0 0
  %206 = vmatprep.subr.bf16.mxu0 0
  %207 = vmatpush1.bf16.msra.mxu0 0
  %208 = vmatprep.mubr.bf16.mxu0 0
  %209 = vmatmul.mubr.bf16.gmra.mrb[0].mxu0 %v112
  %v210 = vpop.f32.mrb[0].mxu0
  %v211 = vadd.f32 0.0, %v210
  %v212 = vpop.f32.mrb[0].mxu0
  %v213 = vpop.f32.mrb[0].mxu0
  %v214 = vadd.f32 0.0, %v213
  %v215 = vpop.f32.mrb[0].mxu0
  %216 = vmatprep.mubr.bf16.mxu0 0
  %217 = vmatmul.mubr.bf16.gmra.mrb[0].mxu0 %v113
  %v218 = vpop.f32.mrb[0].mxu0
  %v219 = vadd.f32 0.0, %v218
  %v220 = vpop.f32.mrb[0].mxu0
  %v221 = vpop.f32.mrb[0].mxu0
  %v222 = vadd.f32 0.0, %v221
  %v223 = vpop.f32.mrb[0].mxu0
  %224 = vmatprep.mubr.bf16.mxu0 0
  %225 = vmatmul.mubr.bf16.gmra.mrb[0].mxu0 %v114
  %v226 = vpop.f32.mrb[0].mxu0
  %v227 = vadd.f32 0.0, %v226
  %v228 = vpop.f32.mrb[0].mxu0
  %v229 = vpop.f32.mrb[0].mxu0
  %v230 = vadd.f32 0.0, %v229
  %v231 = vpop.f32.mrb[0].mxu0
  %232 = vmatprep.mubr.bf16.mxu0 0
  %233 = vmatmul.mubr.bf16.gmra.mrb[0].mxu0 %v115
  %v234 = vpop.f32.mrb[0].mxu0
  %v235 = vadd.f32 0.0, %v234
  %v236 = vpop.f32.mrb[0].mxu0
  %v237 = vpop.f32.mrb[0].mxu0
  %v238 = vadd.f32 0.0, %v237
  %v239 = vpop.f32.mrb[0].mxu0
  %240 = vmatprep.mubr.bf16.mxu0 0
  %241 = vmatmul.mubr.bf16.gmra.mrb[0].mxu0 %v116
  %v242 = vpop.f32.mrb[0].mxu0
  %v243 = vadd.f32 0.0, %v242
  %v244 = vpop.f32.mrb[0].mxu0
  %v245 = vpop.f32.mrb[0].mxu0
  %v246 = vadd.f32 0.0, %v245
  %v247 = vpop.f32.mrb[0].mxu0
  %248 = vmatprep.mubr.bf16.mxu0 0
  %249 = vmatmul.mubr.bf16.gmra.mrb[0].mxu0 %v117
  %v250 = vpop.f32.mrb[0].mxu0
  %v251 = vadd.f32 0.0, %v250
  %v252 = vpop.f32.mrb[0].mxu0
  %v253 = vpop.f32.mrb[0].mxu0
  %v254 = vadd.f32 0.0, %v253
  %v255 = vpop.f32.mrb[0].mxu0
  %256 = vmatprep.mubr.bf16.mxu0 0
  %257 = vmatmul.mubr.bf16.gmra.mrb[0].mxu0 %v118
  %v258 = vpop.f32.mrb[0].mxu0
  %v259 = vadd.f32 0.0, %v258
  %v260 = vpop.f32.mrb[0].mxu0
  %v261 = vpop.f32.mrb[0].mxu0
  %v262 = vadd.f32 0.0, %v261
  %v263 = vpop.f32.mrb[0].mxu0
  %264 = vmatprep.mubr.bf16.mxu0 0
  %265 = vmatmul.mubr.bf16.gmra.mrb[0].mxu0 %v119
  %v266 = vpop.f32.mrb[0].mxu0
  %v267 = vadd.f32 0.0, %v266
  %v268 = vpop.f32.mrb[0].mxu0
  %v269 = vpop.f32.mrb[0].mxu0
  %v270 = vadd.f32 0.0, %v269
  %v271 = vpop.f32.mrb[0].mxu0
  %272 = vdwg.mxu0
  %v273 = vadd.f32 %v32, %v211
  %v274 = vadd.f32 %v33, %v214
  %v275 = vadd.f32 %v34, %v219
  %v276 = vadd.f32 %v35, %v222
  %v277 = vadd.f32 %v36, %v227
  %v278 = vadd.f32 %v37, %v230
  %v279 = vadd.f32 %v38, %v235
  %v280 = vadd.f32 %v39, %v238
  %v281 = vadd.f32 %v40, %v243
  %v282 = vadd.f32 %v41, %v246
  %v283 = vadd.f32 %v42, %v251
  %v284 = vadd.f32 %v43, %v254
  %v285 = vadd.f32 %v44, %v259
  %v286 = vadd.f32 %v45, %v262
  %v287 = vadd.f32 %v46, %v267
  %v288 = vadd.f32 %v47, %v270
  %289 = vst [vmem:[#allocation2] sm:$0xff] %v273
  %290 = vst [vmem:[#allocation2 + $0x8] sm:$0xff] %v274
  %291 = vst [vmem:[#allocation2 + $0x10] sm:$0xff] %v275
  %292 = vst [vmem:[#allocation2 + $0x18] sm:$0xff] %v276
  %293 = vst [vmem:[#allocation2 + $0x20] sm:$0xff] %v277
  %294 = vst [vmem:[#allocation2 + $0x28] sm:$0xff] %v278
  %295 = vst [vmem:[#allocation2 + $0x30] sm:$0xff] %v279
  %296 = vst [vmem:[#allocation2 + $0x38] sm:$0xff] %v280
  %297 = vst [vmem:[#allocation2 + $0x40] sm:$0xff] %v281
  %298 = vst [vmem:[#allocation2 + $0x48] sm:$0xff] %v282
  %299 = vst [vmem:[#allocation2 + $0x50] sm:$0xff] %v283
  %300 = vst [vmem:[#allocation2 + $0x58] sm:$0xff] %v284
  %301 = vst [vmem:[#allocation2 + $0x60] sm:$0xff] %v285
  %302 = vst [vmem:[#allocation2 + $0x68] sm:$0xff] %v286
  %303 = vst [vmem:[#allocation2 + $0x70] sm:$0xff] %v287
  %304 = vst [vmem:[#allocation2 + $0x78] sm:$0xff] %v288
  // Predicated region
  $region14: #{sgc_forward.2} parent=0 // pred_check
    %p305 = pneg %p12
  $region15: #{sgc_forward.2} parent=0 // pred_check_branch
    %307 = sbr.rel (%p305) target = $region17
  $region16: #{sgc_forward.2} parent=0 // pred_region
    %v308 = vld [vmem:[#allocation2] sm:$0xff]
    %v309 = vld [vmem:[#allocation2 + $0x8] sm:$0xff]
    %v310 = vld [vmem:[#allocation2 + $0x10] sm:$0xff]
    %v311 = vld [vmem:[#allocation2 + $0x18] sm:$0xff]
    %v312 = vld [vmem:[#allocation2 + $0x20] sm:$0xff]
    %v313 = vld [vmem:[#allocation2 + $0x28] sm:$0xff]
    %v314 = vld [vmem:[#allocation2 + $0x30] sm:$0xff]
    %v315 = vld [vmem:[#allocation2 + $0x38] sm:$0xff]
    %v316 = vld [vmem:[#allocation2 + $0x40] sm:$0xff]
    %v317 = vld [vmem:[#allocation2 + $0x48] sm:$0xff]
    %v318 = vld [vmem:[#allocation2 + $0x50] sm:$0xff]
    %v319 = vld [vmem:[#allocation2 + $0x58] sm:$0xff]
    %v320 = vld [vmem:[#allocation2 + $0x60] sm:$0xff]
    %v321 = vld [vmem:[#allocation2 + $0x68] sm:$0xff]
    %v322 = vld [vmem:[#allocation2 + $0x70] sm:$0xff]
    %v323 = vld [vmem:[#allocation2 + $0x78] sm:$0xff]
    %v324 = vpack.c.bf16 %v309, %v308
    %v325 = vpack.c.bf16 %v311, %v310
    %v326 = vpack.c.bf16 %v313, %v312
    %v327 = vpack.c.bf16 %v315, %v314
    %v328 = vpack.c.bf16 %v317, %v316
    %v329 = vpack.c.bf16 %v319, %v318
    %v330 = vpack.c.bf16 %v321, %v320
    %v331 = vpack.c.bf16 %v323, %v322
    %v340 = vunpack.c.l.b16 %v324
    %v341 = vunpack.c.h.b16 %v324
    %v342 = vunpack.c.l.b16 %v325
    %v343 = vunpack.c.h.b16 %v325
    %v344 = vunpack.c.l.b16 %v326
    %v345 = vunpack.c.h.b16 %v326
    %v346 = vunpack.c.l.b16 %v327
    %v347 = vunpack.c.h.b16 %v327
    %v348 = vunpack.c.l.b16 %v328
    %v349 = vunpack.c.h.b16 %v328
    %v350 = vunpack.c.l.b16 %v329
    %v351 = vunpack.c.h.b16 %v329
    %v352 = vunpack.c.l.b16 %v330
    %v353 = vunpack.c.h.b16 %v330
    %v354 = vunpack.c.l.b16 %v331
    %v355 = vunpack.c.h.b16 %v331
    %v356 = vpack.c.b16 %v340, %v340
    %v357 = vpack.c.b16 %v341, %v341
    %v358 = vpack.c.b16 %v342, %v342
    %v359 = vpack.c.b16 %v343, %v343
    %v360 = vpack.c.b16 %v344, %v344
    %v361 = vpack.c.b16 %v345, %v345
    %v362 = vpack.c.b16 %v346, %v346
    %v363 = vpack.c.b16 %v347, %v347
    %v364 = vpack.c.b16 %v348, %v348
    %v365 = vpack.c.b16 %v349, %v349
    %v366 = vpack.c.b16 %v350, %v350
    %v367 = vpack.c.b16 %v351, %v351
    %v368 = vpack.c.b16 %v352, %v352
    %v369 = vpack.c.b16 %v353, %v353
    %v370 = vpack.c.b16 %v354, %v354
    %v371 = vpack.c.b16 %v355, %v355
    %388 = vst [vmem:[%s2] sm:$0xf] %v356
    %389 = vst [vmem:[%s2 + $0x4] sm:$0xf] %v357
    %390 = vst [vmem:[%s2 + $0x8] sm:$0xf] %v358
    %391 = vst [vmem:[%s2 + $0xc] sm:$0xf] %v359
    %392 = vst [vmem:[%s2 + $0x10] sm:$0xf] %v360
    %393 = vst [vmem:[%s2 + $0x14] sm:$0xf] %v361
    %394 = vst [vmem:[%s2 + $0x18] sm:$0xf] %v362
    %395 = vst [vmem:[%s2 + $0x1c] sm:$0xf] %v363
    %396 = vst [vmem:[%s2 + $0x20] sm:$0xf] %v364
    %397 = vst [vmem:[%s2 + $0x24] sm:$0xf] %v365
    %398 = vst [vmem:[%s2 + $0x28] sm:$0xf] %v366
    %399 = vst [vmem:[%s2 + $0x2c] sm:$0xf] %v367
    %400 = vst [vmem:[%s2 + $0x30] sm:$0xf] %v368
    %401 = vst [vmem:[%s2 + $0x34] sm:$0xf] %v369
    %402 = vst [vmem:[%s2 + $0x38] sm:$0xf] %v370
    %403 = vst [vmem:[%s2 + $0x3c] sm:$0xf] %v371
  $region17: #{sgc_forward.2} parent=0 // pred_fallthru
    _
  // Predicated region
  $region18: #{sgc_forward.2} parent=0 // pred_check
    _
  $region19: #{sgc_forward.2} parent=0 // pred_check_branch
    %405 = sbr.rel (0) target = $region21
  $region20: #{sgc_forward.2} parent=0 // pred_region
    _
  $region21: #{sgc_forward.2} parent=0 // pred_fallthru
    _
  // Predicated region
  $region22: #{sgc_forward.2} parent=0 // pred_check
    _
  $region23: #{sgc_forward.2} parent=0 // pred_check_branch
    %407 = sbr.rel (0) target = $region25
  $region24: #{sgc_forward.2} parent=0 // pred_region
    _
  $region25: #{sgc_forward.2} parent=0 // pred_fallthru
    _

// kernel: sgc_forward.3
$region0: #{sgc_forward.3}
  #allocation0 [shape = 'u32[]', space=smem, size = 0x4, offset = 0x4, fixed_abs, tag = 'smem constant byte address 0x4 - core index']
  #allocation1 [shape = 'u32[144,128]{1,0:T(1,128)}', space=vmem, size = 0x12000, scoped, tag = 'internal scratch']
  #allocation2 [shape = 'bf16[2,128,128]{2,1,0:T(16,128)(2,1)}', space=vmem, size = 0x10000, scoped, tag = 'scratch operand']
  #allocation3 [shape = 'f32[128,128]{1,0:T(8,128)}', space=vmem, size = 0x10000, scoped, tag = 'scratch operand']
  %s0 = inlined_call_operand.vmem [shape: bf16[128,128], index: 0, kind: input, shape index: {}]
  %s1 = inlined_call_operand.vmem [shape: bf16[128,128], index: 1, kind: input, shape index: {}]
  %s2 = inlined_call_operand.vmem [shape: f32[1,128], index: 2, kind: input, shape index: {}]
  %s3 = inlined_call_operand.vmem [shape: f32[128,128], index: 3, kind: output, shape index: {}]
  %s4 = sld [smem:[#allocation0]]
  $region65: #{sgc_forward.3} parent=0
    _
  %s6 = ssub.s32 1, %s4
  %s7 = scalar_select 0, %s6, %s4
  loop: start=0, step=1, limit=4
  $region2: #{sgc_forward.3} parent=0 // loop_pre_header
    _
  $region3: #{sgc_forward.3} parent=0 // loop_header
    %s9 = sphi 0, %s13
    %p10 = scmp.ge.s32.totalorder %s9, 4
    %s16 = sphi 0, %s35
    %s17 = sphi 0, %s31
    %s18 = sphi 0, %s27
    %s19 = sphi 0, %s16
    %s20 = sphi 0, %s17
    %s21 = sphi 0, %s18
    %s22 = sphi 0, %s19
    %s23 = sphi 0, %s20
    %s24 = sphi 0, %s21
    %s36 = sphi 0, %s36
    %s38 = sphi 0, %s36
    %s39 = sphi 0, %s38
    %s53 = sphi 0, %s39
    %s57 = sphi 0, %s57
    %s59 = sphi 0, %s57
    %s60 = sphi 0, %s59
    %s74 = sphi 0, %s60
    %s78 = sphi 0, %s78
    %s80 = sphi 0, %s78
    %s81 = sphi 0, %s80
    %s95 = sphi 0, %s81
    %s101 = sphi 0, %s103
    %s104 = sphi 0, %s101
    %s105 = sphi 0, %s104
    %s121 = sphi 0, %s105
  $region4: #{sgc_forward.3} parent=0 // loop_header_branch
    %12 = sbr.rel (%p10) target = $region8
  $region5: #{sgc_forward.3} parent=0 // loop_body
    %s14 = ssub.s32 %s9, 1
    %s15 = ssub.s32 %s9, 2
    %s25 = sadd.s32 1, %s18
    %p26 = scmp.ge.s32.totalorder %s25, 1
    %s27 = scalar_select %p26, 0, %s25
    %s28 = sadd.s32 1, %s17
    %s29 = scalar_select %p26, %s28, %s17
    %p30 = scmp.ge.s32.totalorder %s29, 1
    %s31 = scalar_select %p30, 0, %s29
    %s32 = sadd.s32 1, %s16
    %s33 = scalar_select %p30, %s32, %s16
    %p34 = scmp.ge.s32.totalorder %s33, 2
    %s35 = scalar_select %p34, 0, %s33
    %s37 = sadd.s32 %s36, 1
    %p40 = scmp.eq.s32.totalorder %s9, 1
    %p41 = scmp.ne.s32.totalorder %s36, %s38
    %p42 = scmp.eq.s32.totalorder %s9, 0
    %p43 = por %p41, %p42
    %p44 = scmp.ne.s32.totalorder %s36, %s38
    %p45 = scmp.eq.s32.totalorder %s14, 1
    %p46 = por %p44, %p45
    %p47 = scmp.ne.s32.totalorder %s38, %s39
    %p48 = scmp.eq.s32.totalorder %s14, 0
    %p49 = por %p47, %p48
    %p50 = scmp.ne.s32.totalorder %s38, %s39
    %p51 = scmp.eq.s32.totalorder %s15, 1
    %p52 = por %p50, %p51
    %p54 = scmp.ne.s32.totalorder %s39, %s53
    %p55 = scmp.eq.s32.totalorder %s15, 0
    %p56 = por %p54, %p55
    %s58 = sadd.s32 %s57, 1
    %p61 = scmp.eq.s32.totalorder %s9, 1
    %p62 = scmp.ne.s32.totalorder %s57, %s59
    %p63 = scmp.eq.s32.totalorder %s9, 0
    %p64 = por %p62, %p63
    %p65 = scmp.ne.s32.totalorder %s57, %s59
    %p66 = scmp.eq.s32.totalorder %s14, 1
    %p67 = por %p65, %p66
    %p68 = scmp.ne.s32.totalorder %s59, %s60
    %p69 = scmp.eq.s32.totalorder %s14, 0
    %p70 = por %p68, %p69
    %p71 = scmp.ne.s32.totalorder %s59, %s60
    %p72 = scmp.eq.s32.totalorder %s15, 1
    %p73 = por %p71, %p72
    %p75 = scmp.ne.s32.totalorder %s60, %s74
    %p76 = scmp.eq.s32.totalorder %s15, 0
    %p77 = por %p75, %p76
    %s79 = sadd.s32 %s78, 1
    %p82 = scmp.eq.s32.totalorder %s9, 1
    %p83 = scmp.ne.s32.totalorder %s78, %s80
    %p84 = scmp.eq.s32.totalorder %s9, 0
    %p85 = por %p83, %p84
    %p86 = scmp.ne.s32.totalorder %s78, %s80
    %p87 = scmp.eq.s32.totalorder %s14, 1
    %p88 = por %p86, %p87
    %p89 = scmp.ne.s32.totalorder %s80, %s81
    %p90 = scmp.eq.s32.totalorder %s14, 0
    %p91 = por %p89, %p90
    %p92 = scmp.ne.s32.totalorder %s80, %s81
    %p93 = scmp.eq.s32.totalorder %s15, 1
    %p94 = por %p92, %p93
    %p96 = scmp.ne.s32.totalorder %s81, %s95
    %p97 = scmp.eq.s32.totalorder %s15, 0
    %p98 = por %p96, %p97
    %s99 = ssub.s32 %s17, %s31
    %p100 = scmp.eq.s32.totalorder %s99, 0
    %s102 = sadd.s32 %s101, 1
    %s103 = scalar_select %p100, %s101, %s102
    %p106 = pneg %p100
    %p107 = scmp.eq.s32.totalorder %s9, 1
    %p108 = por %p106, %p107
    %p109 = scmp.ne.s32.totalorder %s101, %s104
    %p110 = scmp.eq.s32.totalorder %s9, 0
    %p111 = por %p109, %p110
    %p112 = scmp.ne.s32.totalorder %s101, %s104
    %p113 = scmp.eq.s32.totalorder %s14, 1
    %p114 = por %p112, %p113
    %p115 = scmp.ne.s32.totalorder %s104, %s105
    %p116 = scmp.eq.s32.totalorder %s14, 0
    %p117 = por %p115, %p116
    %p118 = scmp.ne.s32.totalorder %s104, %s105
    %p119 = scmp.eq.s32.totalorder %s15, 1
    %p120 = por %p118, %p119
    %p122 = scmp.ne.s32.totalorder %s105, %s121
    %p123 = scmp.eq.s32.totalorder %s15, 0
    %p124 = por %p122, %p123
    %p125 = scmp.le.s32.totalorder 1, %s9
    %p126 = scmp.lt.s32.totalorder %s9, 3
    %p127 = pnand %p125, %p126
    %p128 = pneg %p127
    // Predicated region
    $region9: #{sgc_forward.3} parent=5 // pred_check
      _
    $region10: #{sgc_forward.3} parent=5 // pred_check_branch
      %130 = sbr.rel (%p127) target = $region12
    $region11: #{sgc_forward.3} parent=5 // pred_region
      %s131 = ssub.s32 %s9, 1
      // Predicated region
      $region13: #{sgc_forward.3} parent=11 // pred_check
        %p132 = pneg %p49
      $region14: #{sgc_forward.3} parent=11 // pred_check_branch
        %134 = sbr.rel (%p132) target = $region16
      $region15: #{sgc_forward.3} parent=11 // pred_region
        _
      $region16: #{sgc_forward.3} parent=11 // pred_fallthru
        _
      // Predicated region
      $region17: #{sgc_forward.3} parent=11 // pred_check
        %p135 = pneg %p70
      $region18: #{sgc_forward.3} parent=11 // pred_check_branch
        %137 = sbr.rel (%p135) target = $region20
      $region19: #{sgc_forward.3} parent=11 // pred_region
        _
      $region20: #{sgc_forward.3} parent=11 // pred_fallthru
        _
      // Predicated region
      $region21: #{sgc_forward.3} parent=11 // pred_check
        %p138 = pneg %p91
      $region22: #{sgc_forward.3} parent=11 // pred_check_branch
        %140 = sbr.rel (%p138) target = $region24
      $region23: #{sgc_forward.3} parent=11 // pred_region
        _
      $region24: #{sgc_forward.3} parent=11 // pred_fallthru
        _
    $region12: #{sgc_forward.3} parent=5 // pred_fallthru
      _
    %p141 = scmp.lt.s32.totalorder %s9, 2
    // Predicated region
    $region25: #{sgc_forward.3} parent=5 // pred_check
      %p142 = pneg %p141
    $region26: #{sgc_forward.3} parent=5 // pred_check_branch
      %144 = sbr.rel (%p142) target = $region28
    $region27: #{sgc_forward.3} parent=5 // pred_region
      _
    $region28: #{sgc_forward.3} parent=5 // pred_fallthru
      _
    %p145 = scmp.le.s32.totalorder 1, %s9
    %p146 = scmp.lt.s32.totalorder %s9, 3
    %p147 = pnand %p145, %p146
    %p148 = pneg %p147
    // Predicated region
    $region29: #{sgc_forward.3} parent=5 // pred_check
      _
    $region30: #{sgc_forward.3} parent=5 // pred_check_branch
      %150 = sbr.rel (%p147) target = $region32
    $region31: #{sgc_forward.3} parent=5 // pred_region
      %s151 = ssub.s32 %s9, 1
      %p152 = pneg %p49
      %p153 = pneg %p46
      %p154 = pneg %p70
      %p155 = pneg %p67
      %p156 = pneg %p91
      %p157 = pneg %p88
      %p158 = pneg %p117
      %p159 = pneg %p114
      %s160 = smul.u32 16, %s20
      %p161 = scmp.lt.s32.totalorder %s160, 15
      %s162 = scalar_select %p161, %s160, 15
      %s163 = smul.addr %s162, 8
      %s164 = scalar_lea.vmem %s3, %s163
      %s165 = smul.u32 16, %s20
      %p166 = scmp.lt.s32.totalorder %s165, 15
      %s167 = scalar_select %p166, %s165, 15
      %s168 = smul.addr %s167, 8
      %s169 = scalar_lea.vmem %s3, %s168
      %s170 = smul.u32 16, %s20
      %s172 = smul.u32 %s20, 128
      %s173 = smul.u32 %s21, 128
      %p174 = scmp.lt.s32.totalorder %s19, 0
      %s175 = ssub.s32 0, %s19
      %s176 = scalar_select %p174, %s175, %s19
      %s177 = sand.u32 %s176, 1
      %s178 = ssub.s32 0, %s177
      %s179 = scalar_select %p174, %s178, %s177
      %p180 = scmp.ne.s32.totalorder %s179, 0
      %p181 = scmp.lt.s32.totalorder %s179, 0
      %p182 = pnand %p181, %p180
      %p183 = pneg %p182
      %s184 = sadd.s32 %s179, 2
      %s185 = scalar_select %p183, %s184, %s179
      %s186 = ssub.s32 1, %s185
      %p187 = scmp.eq.s32.totalorder %s19, 0
      %p188 = scmp.eq.s32.totalorder %s20, 0
      %p189 = pnand %p187, %p188
      %p190 = pneg %p189
      // Predicated region
      $region33: #{sgc_forward.3} parent=31 // pred_check
        _
      $region34: #{sgc_forward.3} parent=31 // pred_check_branch
        %192 = sbr.rel (%p189) target = $region36
      $region35: #{sgc_forward.3} parent=31 // pred_region
        %s193 = sshra.s32 %s173, 3
        %s194 = sand.u32 %s173, 7
        %s195 = smul.addr %s193, 4
        %s196 = scalar_lea.vmem %s1, %s195
        %v197 = vld [vmem:[%s196] sm:$0xf]
        %v198 = vld [vmem:[%s196 + $0x4] sm:$0xf]
        %v199 = vld [vmem:[%s196 + $0x8] sm:$0xf]
        %v200 = vld [vmem:[%s196 + $0xc] sm:$0xf]
        %v201 = vld [vmem:[%s196 + $0x10] sm:$0xf]
        %v202 = vld [vmem:[%s196 + $0x14] sm:$0xf]
        %v203 = vld [vmem:[%s196 + $0x18] sm:$0xf]
        %v204 = vld [vmem:[%s196 + $0x1c] sm:$0xf]
        %v205 = vld [vmem:[%s196 + $0x20] sm:$0xf]
        %v206 = vld [vmem:[%s196 + $0x24] sm:$0xf]
        %v207 = vld [vmem:[%s196 + $0x28] sm:$0xf]
        %v208 = vld [vmem:[%s196 + $0x2c] sm:$0xf]
        %v209 = vld [vmem:[%s196 + $0x30] sm:$0xf]
        %v210 = vld [vmem:[%s196 + $0x34] sm:$0xf]
        %v211 = vld [vmem:[%s196 + $0x38] sm:$0xf]
        %v212 = vld [vmem:[%s196 + $0x3c] sm:$0xf]
        %v229 = vunpack.c.l.b16 %v197
        %v230 = vunpack.c.l.b16 %v198
        %v231 = vunpack.c.l.b16 %v199
        %v232 = vunpack.c.l.b16 %v200
        %v233 = vunpack.c.l.b16 %v201
        %v234 = vunpack.c.l.b16 %v202
        %v235 = vunpack.c.l.b16 %v203
        %v236 = vunpack.c.l.b16 %v204
        %v237 = vunpack.c.l.b16 %v205
        %v238 = vunpack.c.l.b16 %v206
        %v239 = vunpack.c.l.b16 %v207
        %v240 = vunpack.c.l.b16 %v208
        %v241 = vunpack.c.l.b16 %v209
        %v242 = vunpack.c.l.b16 %v210
        %v243 = vunpack.c.l.b16 %v211
        %v244 = vunpack.c.l.b16 %v212
        %v245 = vpack.c.b16 %v230, %v229
        %v246 = vpack.c.b16 %v232, %v231
        %v247 = vpack.c.b16 %v234, %v233
        %v248 = vpack.c.b16 %v236, %v235
        %v249 = vpack.c.b16 %v238, %v237
        %v250 = vpack.c.b16 %v240, %v239
        %v251 = vpack.c.b16 %v242, %v241
        %v252 = vpack.c.b16 %v244, %v243
        %s261 = sshra.s32 %s173, 4
        %s262 = sand.u32 %s173, 15
        %s263 = smul.addr %s261, 8
        %s264 = scalar_lea.vmem [#allocation2], %s263
        %265 = vst [vmem:[%s264] sm:$0xff] %v245
        %266 = vst [vmem:[%s264 + $0x8] sm:$0xff] %v246
        %267 = vst [vmem:[%s264 + $0x10] sm:$0xff] %v247
        %268 = vst [vmem:[%s264 + $0x18] sm:$0xff] %v248
        %269 = vst [vmem:[%s264 + $0x20] sm:$0xff] %v249
        %270 = vst [vmem:[%s264 + $0x28] sm:$0xff] %v250
        %271 = vst [vmem:[%s264 + $0x30] sm:$0xff] %v251
        %272 = vst [vmem:[%s264 + $0x38] sm:$0xff] %v252
      $region36: #{sgc_forward.3} parent=31 // pred_fallthru
        _
      %p273 = scmp.eq.s32.totalorder %s21, 0
      // Predicated region
      $region37: #{sgc_forward.3} parent=31 // pred_check
        %p274 = pneg %p273
      $region38: #{sgc_forward.3} parent=31 // pred_check_branch
        %276 = sbr.rel (%p274) target = $region40
      $region39: #{sgc_forward.3} parent=31 // pred_region
        %277 = vst [vmem:[#allocation3] sm:$0xff] 0.0
        %278 = vst [vmem:[#allocation3 + $0x8] sm:$0xff] 0.0
        %279 = vst [vmem:[#allocation3 + $0x10] sm:$0xff] 0.0
        %280 = vst [vmem:[#allocation3 + $0x18] sm:$0xff] 0.0
        %281 = vst [vmem:[#allocation3 + $0x20] sm:$0xff] 0.0
        %282 = vst [vmem:[#allocation3 + $0x28] sm:$0xff] 0.0
        %283 = vst [vmem:[#allocation3 + $0x30] sm:$0xff] 0.0
        %284 = vst [vmem:[#allocation3 + $0x38] sm:$0xff] 0.0
        %285 = vst [vmem:[#allocation3 + $0x40] sm:$0xff] 0.0
        %286 = vst [vmem:[#allocation3 + $0x48] sm:$0xff] 0.0
        %287 = vst [vmem:[#allocation3 + $0x50] sm:$0xff] 0.0
        %288 = vst [vmem:[#allocation3 + $0x58] sm:$0xff] 0.0
        %289 = vst [vmem:[#allocation3 + $0x60] sm:$0xff] 0.0
        %290 = vst [vmem:[#allocation3 + $0x68] sm:$0xff] 0.0
        %291 = vst [vmem:[#allocation3 + $0x70] sm:$0xff] 0.0
        %292 = vst [vmem:[#allocation3 + $0x78] sm:$0xff] 0.0
      $region40: #{sgc_forward.3} parent=31 // pred_fallthru
        _
      %s293 = sshra.s32 %s173, 7
      %s294 = sand.u32 %s173, 127
      %s295 = sshra.s32 %s172, 3
      %s296 = sand.u32 %s172, 7
      %s297 = sadd.s32 %s293, %s295
      %s298 = smul.addr %s297, 4
      %s299 = scalar_lea.vmem %s0, %s298
      %v300 = vld [vmem:[%s299] sm:$0xf]
      %v301 = vld [vmem:[%s299 + $0x4] sm:$0xf]
      %v302 = vld [vmem:[%s299 + $0x8] sm:$0xf]
      %v303 = vld [vmem:[%s299 + $0xc] sm:$0xf]
      %v304 = vld [vmem:[%s299 + $0x10] sm:$0xf]
      %v305 = vld [vmem:[%s299 + $0x14] sm:$0xf]
      %v306 = vld [vmem:[%s299 + $0x18] sm:$0xf]
      %v307 = vld [vmem:[%s299 + $0x1c] sm:$0xf]
      %v308 = vld [vmem:[%s299 + $0x20] sm:$0xf]
      %v309 = vld [vmem:[%s299 + $0x24] sm:$0xf]
      %v310 = vld [vmem:[%s299 + $0x28] sm:$0xf]
      %v311 = vld [vmem:[%s299 + $0x2c] sm:$0xf]
      %v312 = vld [vmem:[%s299 + $0x30] sm:$0xf]
      %v313 = vld [vmem:[%s299 + $0x34] sm:$0xf]
      %v314 = vld [vmem:[%s299 + $0x38] sm:$0xf]
      %v315 = vld [vmem:[%s299 + $0x3c] sm:$0xf]
      %s316 = sshra.s32 %s173, 4
      %s317 = sand.u32 %s173, 15
      %s318 = smul.u32 %s185, 8
      %s319 = sadd.s32 %s316, %s318
      %s320 = smul.addr %s319, 8
      %s321 = scalar_lea.vmem [#allocation2], %s320
      %v322 = vld [vmem:[%s321] sm:$0xff]
      %v323 = vld [vmem:[%s321 + $0x8] sm:$0xff]
      %v324 = vld [vmem:[%s321 + $0x10] sm:$0xff]
      %v325 = vld [vmem:[%s321 + $0x18] sm:$0xff]
      %v326 = vld [vmem:[%s321 + $0x20] sm:$0xff]
      %v327 = vld [vmem:[%s321 + $0x28] sm:$0xff]
      %v328 = vld [vmem:[%s321 + $0x30] sm:$0xff]
      %v329 = vld [vmem:[%s321 + $0x38] sm:$0xff]
      %v330 = vld [vmem:[#allocation3] sm:$0xff]
      %v331 = vld [vmem:[#allocation3 + $0x8] sm:$0xff]
      %v332 = vld [vmem:[#allocation3 + $0x10] sm:$0xff]
      %v333 = vld [vmem:[#allocation3 + $0x18] sm:$0xff]
      %v334 = vld [vmem:[#allocation3 + $0x20] sm:$0xff]
      %v335 = vld [vmem:[#allocation3 + $0x28] sm:$0xff]
      %v336 = vld [vmem:[#allocation3 + $0x30] sm:$0xff]
      %v337 = vld [vmem:[#allocation3 + $0x38] sm:$0xff]
      %v338 = vld [vmem:[#allocation3 + $0x40] sm:$0xff]
      %v339 = vld [vmem:[#allocation3 + $0x48] sm:$0xff]
      %v340 = vld [vmem:[#allocation3 + $0x50] sm:$0xff]
      %v341 = vld [vmem:[#allocation3 + $0x58] sm:$0xff]
      %v342 = vld [vmem:[#allocation3 + $0x60] sm:$0xff]
      %v343 = vld [vmem:[#allocation3 + $0x68] sm:$0xff]
      %v344 = vld [vmem:[#allocation3 + $0x70] sm:$0xff]
      %v345 = vld [vmem:[#allocation3 + $0x78] sm:$0xff]
      %v362 = vunpack.c.l.b16 %v300
      %v363 = vunpack.c.l.b16 %v301
      %v364 = vunpack.c.l.b16 %v302
      %v365 = vunpack.c.l.b16 %v303
      %v366 = vunpack.c.l.b16 %v304
      %v367 = vunpack.c.l.b16 %v305
      %v368 = vunpack.c.l.b16 %v306
      %v369 = vunpack.c.l.b16 %v307
      %v370 = vunpack.c.l.b16 %v308
      %v371 = vunpack.c.l.b16 %v309
      %v372 = vunpack.c.l.b16 %v310
      %v373 = vunpack.c.l.b16 %v311
      %v374 = vunpack.c.l.b16 %v312
      %v375 = vunpack.c.l.b16 %v313
      %v376 = vunpack.c.l.b16 %v314
      %v377 = vunpack.c.l.b16 %v315
      %v378 = vpack.c.b16 %v363, %v362
      %v379 = vpack.c.b16 %v365, %v364
      %v380 = vpack.c.b16 %v367, %v366
      %v381 = vpack.c.b16 %v369, %v368
      %v382 = vpack.c.b16 %v371, %v370
      %v383 = vpack.c.b16 %v373, %v372
      %v384 = vpack.c.b16 %v375, %v374
      %v385 = vpack.c.b16 %v377, %v376
      %394 = vmatprep.subr.bf16.mxu0 0
      %395 = vmatpush1.bf16.msra.mxu0 %v322
      %396 = vmatprep.subr.bf16.mxu0 0
      %397 = vmatpush1.bf16.msra.mxu0 %v323
      %398 = vmatprep.subr.bf16.mxu0 0
      %399 = vmatpush1.bf16.msra.mxu0 %v324
      %400 = vmatprep.subr.bf16.mxu0 0
      %401 = vmatpush1.bf16.msra.mxu0 %v325
      %402 = vmatprep.subr.bf16.mxu0 0
      %403 = vmatpush1.bf16.msra.mxu0 %v326
      %404 = vmatprep.subr.bf16.mxu0 0
      %405 = vmatpush1.bf16.msra.mxu0 %v327
      %406 = vmatprep.subr.bf16.mxu0 0
      %407 = vmatpush1.bf16.msra.mxu0 %v328
      %408 = vmatprep.subr.bf16.mxu0 0
      %409 = vmatpush1.bf16.msra.mxu0 %v329
      %410 = vmatprep.subr.bf16.mxu0 0
      %411 = vmatpush1.bf16.msra.mxu0 0
      %412 = vmatprep.subr.bf16.mxu0 0
      %413 = vmatpush1.bf16.msra.mxu0 0
      %414 = vmatprep.subr.bf16.mxu0 0
      %415 = vmatpush1.bf16.msra.mxu0 0
      %416 = vmatprep.subr.bf16.mxu0 0
      %417 = vmatpush1.bf16.msra.mxu0 0
      %418 = vmatprep.subr.bf16.mxu0 0
      %419 = vmatpush1.bf16.msra.mxu0 0
      %420 = vmatprep.subr.bf16.mxu0 0
      %421 = vmatpush1.bf16.msra.mxu0 0
      %422 = vmatprep.subr.bf16.mxu0 0
      %423 = vmatpush1.bf16.msra.mxu0 0
      %424 = vmatprep.subr.bf16.mxu0 0
      %425 = vmatpush1.bf16.msra.mxu0 0
      %426 = vmatprep.mubr.bf16.mxu0 0
      %427 = vmatmul.mubr.bf16.gmra.mrb[0].mxu0 %v378
      %v428 = vpop.f32.mrb[0].mxu0
      %v429 = vadd.f32 0.0, %v428
      %v430 = vpop.f32.mrb[0].mxu0
      %v431 = vpop.f32.mrb[0].mxu0
      %v432 = vadd.f32 0.0, %v431
      %v433 = vpop.f32.mrb[0].mxu0
      %434 = vmatprep.mubr.bf16.mxu0 0
      %435 = vmatmul.mubr.bf16.gmra.mrb[0].mxu0 %v379
      %v436 = vpop.f32.mrb[0].mxu0
      %v437 = vadd.f32 0.0, %v436
      %v438 = vpop.f32.mrb[0].mxu0
      %v439 = vpop.f32.mrb[0].mxu0
      %v440 = vadd.f32 0.0, %v439
      %v441 = vpop.f32.mrb[0].mxu0
      %442 = vmatprep.mubr.bf16.mxu0 0
      %443 = vmatmul.mubr.bf16.gmra.mrb[0].mxu0 %v380
      %v444 = vpop.f32.mrb[0].mxu0
      %v445 = vadd.f32 0.0, %v444
      %v446 = vpop.f32.mrb[0].mxu0
      %v447 = vpop.f32.mrb[0].mxu0
      %v448 = vadd.f32 0.0, %v447
      %v449 = vpop.f32.mrb[0].mxu0
      %450 = vmatprep.mubr.bf16.mxu0 0
      %451 = vmatmul.mubr.bf16.gmra.mrb[0].mxu0 %v381
      %v452 = vpop.f32.mrb[0].mxu0
      %v453 = vadd.f32 0.0, %v452
      %v454 = vpop.f32.mrb[0].mxu0
      %v455 = vpop.f32.mrb[0].mxu0
      %v456 = vadd.f32 0.0, %v455
      %v457 = vpop.f32.mrb[0].mxu0
      %458 = vmatprep.mubr.bf16.mxu0 0
      %459 = vmatmul.mubr.bf16.gmra.mrb[0].mxu0 %v382
      %v460 = vpop.f32.mrb[0].mxu0
      %v461 = vadd.f32 0.0, %v460
      %v462 = vpop.f32.mrb[0].mxu0
      %v463 = vpop.f32.mrb[0].mxu0
      %v464 = vadd.f32 0.0, %v463
      %v465 = vpop.f32.mrb[0].mxu0
      %466 = vmatprep.mubr.bf16.mxu0 0
      %467 = vmatmul.mubr.bf16.gmra.mrb[0].mxu0 %v383
      %v468 = vpop.f32.mrb[0].mxu0
      %v469 = vadd.f32 0.0, %v468
      %v470 = vpop.f32.mrb[0].mxu0
      %v471 = vpop.f32.mrb[0].mxu0
      %v472 = vadd.f32 0.0, %v471
      %v473 = vpop.f32.mrb[0].mxu0
      %474 = vmatprep.mubr.bf16.mxu0 0
      %475 = vmatmul.mubr.bf16.gmra.mrb[0].mxu0 %v384
      %v476 = vpop.f32.mrb[0].mxu0
      %v477 = vadd.f32 0.0, %v476
      %v478 = vpop.f32.mrb[0].mxu0
      %v479 = vpop.f32.mrb[0].mxu0
      %v480 = vadd.f32 0.0, %v479
      %v481 = vpop.f32.mrb[0].mxu0
      %482 = vmatprep.mubr.bf16.mxu0 0
      %483 = vmatmul.mubr.bf16.gmra.mrb[0].mxu0 %v385
      %v484 = vpop.f32.mrb[0].mxu0
      %v485 = vadd.f32 0.0, %v484
      %v486 = vpop.f32.mrb[0].mxu0
      %v487 = vpop.f32.mrb[0].mxu0
      %v488 = vadd.f32 0.0, %v487
      %v489 = vpop.f32.mrb[0].mxu0
      %490 = vdwg.mxu0
      %v491 = vadd.f32 %v330, %v429
      %v492 = vadd.f32 %v331, %v432
      %v493 = vadd.f32 %v332, %v437
      %v494 = vadd.f32 %v333, %v440
      %v495 = vadd.f32 %v334, %v445
      %v496 = vadd.f32 %v335, %v448
      %v497 = vadd.f32 %v336, %v453
      %v498 = vadd.f32 %v337, %v456
      %v499 = vadd.f32 %v338, %v461
      %v500 = vadd.f32 %v339, %v464
      %v501 = vadd.f32 %v340, %v469
      %v502 = vadd.f32 %v341, %v472
      %v503 = vadd.f32 %v342, %v477
      %v504 = vadd.f32 %v343, %v480
      %v505 = vadd.f32 %v344, %v485
      %v506 = vadd.f32 %v345, %v488
      %507 = vst [vmem:[#allocation3] sm:$0xff] %v491
      %508 = vst [vmem:[#allocation3 + $0x8] sm:$0xff] %v492
      %509 = vst [vmem:[#allocation3 + $0x10] sm:$0xff] %v493
      %510 = vst [vmem:[#allocation3 + $0x18] sm:$0xff] %v494
      %511 = vst [vmem:[#allocation3 + $0x20] sm:$0xff] %v495
      %512 = vst [vmem:[#allocation3 + $0x28] sm:$0xff] %v496
      %513 = vst [vmem:[#allocation3 + $0x30] sm:$0xff] %v497
      %514 = vst [vmem:[#allocation3 + $0x38] sm:$0xff] %v498
      %515 = vst [vmem:[#allocation3 + $0x40] sm:$0xff] %v499
      %516 = vst [vmem:[#allocation3 + $0x48] sm:$0xff] %v500
      %517 = vst [vmem:[#allocation3 + $0x50] sm:$0xff] %v501
      %518 = vst [vmem:[#allocation3 + $0x58] sm:$0xff] %v502
      %519 = vst [vmem:[#allocation3 + $0x60] sm:$0xff] %v503
      %520 = vst [vmem:[#allocation3 + $0x68] sm:$0xff] %v504
      %521 = vst [vmem:[#allocation3 + $0x70] sm:$0xff] %v505
      %522 = vst [vmem:[#allocation3 + $0x78] sm:$0xff] %v506
      // Predicated region
      $region41: #{sgc_forward.3} parent=31 // pred_check
        %p523 = pneg %p273
      $region42: #{sgc_forward.3} parent=31 // pred_check_branch
        %525 = sbr.rel (%p523) target = $region44
      $region43: #{sgc_forward.3} parent=31 // pred_region
        %p526 = scmp.lt.s32.totalorder %s19, 1
        // Predicated region
        $region45: #{sgc_forward.3} parent=43 // pred_check
          %p527 = pneg %p526
        $region46: #{sgc_forward.3} parent=43 // pred_check_branch
          %529 = sbr.rel (%p527) target = $region48
        $region47: #{sgc_forward.3} parent=43 // pred_region
          %v530 = vld [vmem:[#allocation3] sm:$0xff]
          %v531 = vld [vmem:[#allocation3 + $0x8] sm:$0xff]
          %v532 = vld [vmem:[#allocation3 + $0x10] sm:$0xff]
          %v533 = vld [vmem:[#allocation3 + $0x18] sm:$0xff]
          %v534 = vld [vmem:[#allocation3 + $0x20] sm:$0xff]
          %v535 = vld [vmem:[#allocation3 + $0x28] sm:$0xff]
          %v536 = vld [vmem:[#allocation3 + $0x30] sm:$0xff]
          %v537 = vld [vmem:[#allocation3 + $0x38] sm:$0xff]
          %v538 = vld [vmem:[#allocation3 + $0x40] sm:$0xff]
          %v539 = vld [vmem:[#allocation3 + $0x48] sm:$0xff]
          %v540 = vld [vmem:[#allocation3 + $0x50] sm:$0xff]
          %v541 = vld [vmem:[#allocation3 + $0x58] sm:$0xff]
          %v542 = vld [vmem:[#allocation3 + $0x60] sm:$0xff]
          %v543 = vld [vmem:[#allocation3 + $0x68] sm:$0xff]
          %v544 = vld [vmem:[#allocation3 + $0x70] sm:$0xff]
          %v545 = vld [vmem:[#allocation3 + $0x78] sm:$0xff]
          %v546 = vpack.c.bf16 %v531, %v530
          %v547 = vpack.c.bf16 %v533, %v532
          %v548 = vpack.c.bf16 %v535, %v534
          %v549 = vpack.c.bf16 %v537, %v536
          %v550 = vpack.c.bf16 %v539, %v538
          %v551 = vpack.c.bf16 %v541, %v540
          %v552 = vpack.c.bf16 %v543, %v542
          %v553 = vpack.c.bf16 %v545, %v544
          %s554 = sshra.s32 %s172, 4
          %s555 = sand.u32 %s172, 15
          %s556 = smul.u32 %s186, 8
          %s557 = sadd.s32 %s554, %s556
          %s558 = smul.addr %s557, 8
          %s559 = scalar_lea.vmem [#allocation2], %s558
          %560 = vst [vmem:[%s559] sm:$0xff] %v546
          %561 = vst [vmem:[%s559 + $0x8] sm:$0xff] %v547
          %562 = vst [vmem:[%s559 + $0x10] sm:$0xff] %v548
          %563 = vst [vmem:[%s559 + $0x18] sm:$0xff] %v549
          %564 = vst [vmem:[%s559 + $0x20] sm:$0xff] %v550
          %565 = vst [vmem:[%s559 + $0x28] sm:$0xff] %v551
          %566 = vst [vmem:[%s559 + $0x30] sm:$0xff] %v552
          %567 = vst [vmem:[%s559 + $0x38] sm:$0xff] %v553
        $region48: #{sgc_forward.3} parent=43 // pred_fallthru
          _
        %p568 = scmp.eq.s32.totalorder %s19, 1
        // Predicated region
        $region49: #{sgc_forward.3} parent=43 // pred_check
          %p569 = pneg %p568
        $region50: #{sgc_forward.3} parent=43 // pred_check_branch
          %571 = sbr.rel (%p569) target = $region52
        $region51: #{sgc_forward.3} parent=43 // pred_region
          %v572 = vld [vmem:[#allocation3] sm:$0xff]
          %v573 = vld [vmem:[#allocation3 + $0x8] sm:$0xff]
          %v574 = vld [vmem:[#allocation3 + $0x10] sm:$0xff]
          %v575 = vld [vmem:[#allocation3 + $0x18] sm:$0xff]
          %v576 = vld [vmem:[#allocation3 + $0x20] sm:$0xff]
          %v577 = vld [vmem:[#allocation3 + $0x28] sm:$0xff]
          %v578 = vld [vmem:[#allocation3 + $0x30] sm:$0xff]
          %v579 = vld [vmem:[#allocation3 + $0x38] sm:$0xff]
          %v580 = vld [vmem:[#allocation3 + $0x40] sm:$0xff]
          %v581 = vld [vmem:[#allocation3 + $0x48] sm:$0xff]
          %v582 = vld [vmem:[#allocation3 + $0x50] sm:$0xff]
          %v583 = vld [vmem:[#allocation3 + $0x58] sm:$0xff]
          %v584 = vld [vmem:[#allocation3 + $0x60] sm:$0xff]
          %v585 = vld [vmem:[#allocation3 + $0x68] sm:$0xff]
          %v586 = vld [vmem:[#allocation3 + $0x70] sm:$0xff]
          %v587 = vld [vmem:[#allocation3 + $0x78] sm:$0xff]
          %v588 = vld [vmem:[%s2] sm:$0x1]
          %v590 = vlaneseq
          %v591 = vshrl.u32 %v590, 7
          %v592 = vsub.s32 0, %v591
          %v593 = vrot.slane %v588, %v592
          %v595 = vadd.f32 %v572, %v593
          %v596 = vadd.f32 %v573, %v593
          %v597 = vadd.f32 %v574, %v593
          %v598 = vadd.f32 %v575, %v593
          %v599 = vadd.f32 %v576, %v593
          %v600 = vadd.f32 %v577, %v593
          %v601 = vadd.f32 %v578, %v593
          %v602 = vadd.f32 %v579, %v593
          %v603 = vadd.f32 %v580, %v593
          %v604 = vadd.f32 %v581, %v593
          %v605 = vadd.f32 %v582, %v593
          %v606 = vadd.f32 %v583, %v593
          %v607 = vadd.f32 %v584, %v593
          %v608 = vadd.f32 %v585, %v593
          %v609 = vadd.f32 %v586, %v593
          %v610 = vadd.f32 %v587, %v593
          %v611 = vlaneseq
          %v612 = vand.u32 %v611, 127
          %vm613 = vcmp.lt.s32.totalorder %v612, 8
          %v614 = vsel %vm613, %v595, -1e+30
          %v615 = vsel %vm613, %v596, -1e+30
          %v616 = vsel %vm613, %v597, -1e+30
          %v617 = vsel %vm613, %v598, -1e+30
          %v618 = vsel %vm613, %v599, -1e+30
          %v619 = vsel %vm613, %v600, -1e+30
          %v620 = vsel %vm613, %v601, -1e+30
          %v621 = vsel %vm613, %v602, -1e+30
          %v622 = vsel %vm613, %v603, -1e+30
          %v623 = vsel %vm613, %v604, -1e+30
          %v624 = vsel %vm613, %v605, -1e+30
          %v625 = vsel %vm613, %v606, -1e+30
          %v626 = vsel %vm613, %v607, -1e+30
          %v627 = vsel %vm613, %v608, -1e+30
          %v628 = vsel %vm613, %v609, -1e+30
          %v629 = vsel %vm613, %v610, -1e+30
          %630 = vmax.xlane.f32.xlu0 %v614
          %v631 = vpop.xlane.xlu0 %630
          %632 = vmax.xlane.f32.xlu0 %v615
          %v633 = vpop.xlane.xlu0 %632
          %634 = vmax.xlane.f32.xlu0 %v616
          %v635 = vpop.xlane.xlu0 %634
          %636 = vmax.xlane.f32.xlu0 %v617
          %v637 = vpop.xlane.xlu0 %636
          %638 = vmax.xlane.f32.xlu0 %v618
          %v639 = vpop.xlane.xlu0 %638
          %640 = vmax.xlane.f32.xlu0 %v619
          %v641 = vpop.xlane.xlu0 %640
          %642 = vmax.xlane.f32.xlu0 %v620
          %v643 = vpop.xlane.xlu0 %642
          %644 = vmax.xlane.f32.xlu0 %v621
          %v645 = vpop.xlane.xlu0 %644
          %646 = vmax.xlane.f32.xlu0 %v622
          %v647 = vpop.xlane.xlu0 %646
          %648 = vmax.xlane.f32.xlu0 %v623
          %v649 = vpop.xlane.xlu0 %648
          %650 = vmax.xlane.f32.xlu0 %v624
          %v651 = vpop.xlane.xlu0 %650
          %652 = vmax.xlane.f32.xlu0 %v625
          %v653 = vpop.xlane.xlu0 %652
          %654 = vmax.xlane.f32.xlu0 %v626
          %v655 = vpop.xlane.xlu0 %654
          %656 = vmax.xlane.f32.xlu0 %v627
          %v657 = vpop.xlane.xlu0 %656
          %658 = vmax.xlane.f32.xlu0 %v628
          %v659 = vpop.xlane.xlu0 %658
          %660 = vmax.xlane.f32.xlu0 %v629
          %v661 = vpop.xlane.xlu0 %660
          %v662 = vsub.f32 %v614, %v631
          %v663 = vsub.f32 %v615, %v633
          %v664 = vsub.f32 %v616, %v635
          %v665 = vsub.f32 %v617, %v637
          %v666 = vsub.f32 %v618, %v639
          %v667 = vsub.f32 %v619, %v641
          %v668 = vsub.f32 %v620, %v643
          %v669 = vsub.f32 %v621, %v645
          %v670 = vsub.f32 %v622, %v647
          %v671 = vsub.f32 %v623, %v649
          %v672 = vsub.f32 %v624, %v651
          %v673 = vsub.f32 %v625, %v653
          %v674 = vsub.f32 %v626, %v655
          %v675 = vsub.f32 %v627, %v657
          %v676 = vsub.f32 %v628, %v659
          %v677 = vsub.f32 %v629, %v661
          %v678 = vmul.f32 %v662, 1.442695
          %v679 = vpow.pop %v678
          %v680 = vmul.f32 %v663, 1.442695
          %v681 = vpow.pop %v680
          %v682 = vmul.f32 %v664, 1.442695
          %v683 = vpow.pop %v682
          %v684 = vmul.f32 %v665, 1.442695
          %v685 = vpow.pop %v684
          %v686 = vmul.f32 %v666, 1.442695
          %v687 = vpow.pop %v686
          %v688 = vmul.f32 %v667, 1.442695
          %v689 = vpow.pop %v688
          %v690 = vmul.f32 %v668, 1.442695
          %v691 = vpow.pop %v690
          %v692 = vmul.f32 %v669, 1.442695
          %v693 = vpow.pop %v692
          %v694 = vmul.f32 %v670, 1.442695
          %v695 = vpow.pop %v694
          %v696 = vmul.f32 %v671, 1.442695
          %v697 = vpow.pop %v696
          %v698 = vmul.f32 %v672, 1.442695
          %v699 = vpow.pop %v698
          %v700 = vmul.f32 %v673, 1.442695
          %v701 = vpow.pop %v700
          %v702 = vmul.f32 %v674, 1.442695
          %v703 = vpow.pop %v702
          %v704 = vmul.f32 %v675, 1.442695
          %v705 = vpow.pop %v704
          %v706 = vmul.f32 %v676, 1.442695
          %v707 = vpow.pop %v706
          %v708 = vmul.f32 %v677, 1.442695
          %v709 = vpow.pop %v708
          %710 = vadd.xlane.f32.xlu0 %v679
          %v711 = vpop.xlane.xlu0 %710
          %712 = vadd.xlane.f32.xlu0 %v681
          %v713 = vpop.xlane.xlu0 %712
          %714 = vadd.xlane.f32.xlu0 %v683
          %v715 = vpop.xlane.xlu0 %714
          %716 = vadd.xlane.f32.xlu0 %v685
          %v717 = vpop.xlane.xlu0 %716
          %718 = vadd.xlane.f32.xlu0 %v687
          %v719 = vpop.xlane.xlu0 %718
          %720 = vadd.xlane.f32.xlu0 %v689
          %v721 = vpop.xlane.xlu0 %720
          %722 = vadd.xlane.f32.xlu0 %v691
          %v723 = vpop.xlane.xlu0 %722
          %724 = vadd.xlane.f32.xlu0 %v693
          %v725 = vpop.xlane.xlu0 %724
          %726 = vadd.xlane.f32.xlu0 %v695
          %v727 = vpop.xlane.xlu0 %726
          %728 = vadd.xlane.f32.xlu0 %v697
          %v729 = vpop.xlane.xlu0 %728
          %730 = vadd.xlane.f32.xlu0 %v699
          %v731 = vpop.xlane.xlu0 %730
          %732 = vadd.xlane.f32.xlu0 %v701
          %v733 = vpop.xlane.xlu0 %732
          %734 = vadd.xlane.f32.xlu0 %v703
          %v735 = vpop.xlane.xlu0 %734
          %736 = vadd.xlane.f32.xlu0 %v705
          %v737 = vpop.xlane.xlu0 %736
          %738 = vadd.xlane.f32.xlu0 %v707
          %v739 = vpop.xlane.xlu0 %738
          %740 = vadd.xlane.f32.xlu0 %v709
          %v741 = vpop.xlane.xlu0 %740
          %v742 = vlog2.pop %v711
          %v743 = vmul.f32 %v742, 0.6931472
          %v744 = vlog2.pop %v713
          %v745 = vmul.f32 %v744, 0.6931472
          %v746 = vlog2.pop %v715
          %v747 = vmul.f32 %v746, 0.6931472
          %v748 = vlog2.pop %v717
          %v749 = vmul.f32 %v748, 0.6931472
          %v750 = vlog2.pop %v719
          %v751 = vmul.f32 %v750, 0.6931472
          %v752 = vlog2.pop %v721
          %v753 = vmul.f32 %v752, 0.6931472
          %v754 = vlog2.pop %v723
          %v755 = vmul.f32 %v754, 0.6931472
          %v756 = vlog2.pop %v725
          %v757 = vmul.f32 %v756, 0.6931472
          %v758 = vlog2.pop %v727
          %v759 = vmul.f32 %v758, 0.6931472
          %v760 = vlog2.pop %v729
          %v761 = vmul.f32 %v760, 0.6931472
          %v762 = vlog2.pop %v731
          %v763 = vmul.f32 %v762, 0.6931472
          %v764 = vlog2.pop %v733
          %v765 = vmul.f32 %v764, 0.6931472
          %v766 = vlog2.pop %v735
          %v767 = vmul.f32 %v766, 0.6931472
          %v768 = vlog2.pop %v737
          %v769 = vmul.f32 %v768, 0.6931472
          %v770 = vlog2.pop %v739
          %v771 = vmul.f32 %v770, 0.6931472
          %v772 = vlog2.pop %v741
          %v773 = vmul.f32 %v772, 0.6931472
          %v774 = vsub.f32 %v662, %v743
          %v775 = vsub.f32 %v663, %v745
          %v776 = vsub.f32 %v664, %v747
          %v777 = vsub.f32 %v665, %v749
          %v778 = vsub.f32 %v666, %v751
          %v779 = vsub.f32 %v667, %v753
          %v780 = vsub.f32 %v668, %v755
          %v781 = vsub.f32 %v669, %v757
          %v782 = vsub.f32 %v670, %v759
          %v783 = vsub.f32 %v671, %v761
          %v784 = vsub.f32 %v672, %v763
          %v785 = vsub.f32 %v673, %v765
          %v786 = vsub.f32 %v674, %v767
          %v787 = vsub.f32 %v675, %v769
          %v788 = vsub.f32 %v676, %v771
          %v789 = vsub.f32 %v677, %v773
          %790 = vst [vmem:[%s169] sm:$0xff] %v774
          %791 = vst [vmem:[%s169 + $0x8] sm:$0xff] %v775
          %792 = vst [vmem:[%s169 + $0x10] sm:$0xff] %v776
          %793 = vst [vmem:[%s169 + $0x18] sm:$0xff] %v777
          %794 = vst [vmem:[%s169 + $0x20] sm:$0xff] %v778
          %795 = vst [vmem:[%s169 + $0x28] sm:$0xff] %v779
          %796 = vst [vmem:[%s169 + $0x30] sm:$0xff] %v780
          %797 = vst [vmem:[%s169 + $0x38] sm:$0xff] %v781
          %798 = vst [vmem:[%s169 + $0x40] sm:$0xff] %v782
          %799 = vst [vmem:[%s169 + $0x48] sm:$0xff] %v783
          %800 = vst [vmem:[%s169 + $0x50] sm:$0xff] %v784
          %801 = vst [vmem:[%s169 + $0x58] sm:$0xff] %v785
          %802 = vst [vmem:[%s169 + $0x60] sm:$0xff] %v786
          %803 = vst [vmem:[%s169 + $0x68] sm:$0xff] %v787
          %804 = vst [vmem:[%s169 + $0x70] sm:$0xff] %v788
          %805 = vst [vmem:[%s169 + $0x78] sm:$0xff] %v789
        $region52: #{sgc_forward.3} parent=43 // pred_fallthru
          _
      $region44: #{sgc_forward.3} parent=31 // pred_fallthru
        _
      %s806 = smul.u32 16, %s20
      %p807 = scmp.lt.s32.totalorder %s806, 15
      %s808 = scalar_select %p807, %s806, 15
      %s809 = smul.addr %s808, 8
      %s810 = scalar_lea.vmem %s3, %s809
      // Predicated region
      $region53: #{sgc_forward.3} parent=31 // pred_check
        %p811 = pneg %p114
      $region54: #{sgc_forward.3} parent=31 // pred_check_branch
        %813 = sbr.rel (%p811) target = $region56
      $region55: #{sgc_forward.3} parent=31 // pred_region
        %s814 = smul.u32 16, %s20
      $region56: #{sgc_forward.3} parent=31 // pred_fallthru
        _
      // Predicated region
      $region57: #{sgc_forward.3} parent=31 // pred_check
        %p815 = pneg %p114
      $region58: #{sgc_forward.3} parent=31 // pred_check_branch
        %817 = sbr.rel (%p815) target = $region60
      $region59: #{sgc_forward.3} parent=31 // pred_region
        %s818 = smul.u32 16, %s20
        %p819 = scmp.lt.s32.totalorder %s818, 15
        %s820 = scalar_select %p819, %s818, 15
        %s821 = smul.addr %s820, 8
        %s822 = scalar_lea.vmem %s3, %s821
      $region60: #{sgc_forward.3} parent=31 // pred_fallthru
        _
    $region32: #{sgc_forward.3} parent=5 // pred_fallthru
      _
    %p823 = scmp.le.s32.totalorder 2, %s9
    // Predicated region
    $region61: #{sgc_forward.3} parent=5 // pred_check
      %p824 = pneg %p823
    $region62: #{sgc_forward.3} parent=5 // pred_check_branch
      %826 = sbr.rel (%p824) target = $region64
    $region63: #{sgc_forward.3} parent=5 // pred_region
      %s827 = ssub.s32 %s9, 2
    $region64: #{sgc_forward.3} parent=5 // pred_fallthru
      _
  $region6: #{sgc_forward.3} parent=0 // loop_footer
    %s13 = sadd.s32 1, %s9
  $region7: #{sgc_forward.3} parent=0 // loop_footer_branch
    %8 = sbr.rel target = $region3
  $region8: #{sgc_forward.3} parent=0 // loop_exit
    _

</llo_original>
